<compile_context>
chip_gen: v7x
topology: tpu7x:2x2x1
jax: 0.10.0
libtpu: 0.0.40
codegen_flags: <defaults>
</compile_context>

<pallas_src>
import functools

import jax
import jax.numpy as jnp
from jax.experimental import pallas as pl
from jax.experimental.pallas import tpu as pltpu


# ---------------------------------------------------------------------------
# Dense matmul + bias kernel (used for the hoisted input projection and the
# estimation head).  Grid over row tiles, fully parallel.
# ---------------------------------------------------------------------------
def _dense_bias_kernel(x_ref, w_ref, b_ref, o_ref):
    o_ref[...] = (jnp.dot(x_ref[...], w_ref[...], preferred_element_type=jnp.float32)
                  + b_ref[...]).astype(o_ref.dtype)


def _dense(x, w, b, block_m=512):
    """(M, K) @ (K, N) + (1, N) -> (M, N), f32."""
    M, K = x.shape
    N = w.shape[1]
    bm = M if M <= block_m else block_m          # bm == M (full dim) or 512 (mult. of 8)
    M_pad = -(-M // bm) * bm
    if M_pad != M:
        x = jnp.pad(x, ((0, M_pad - M), (0, 0)))

    out = pl.pallas_call(
        _dense_bias_kernel,
        out_shape=jax.ShapeDtypeStruct((M_pad, N), jnp.float32),
        grid_spec=pltpu.PrefetchScalarGridSpec(
            num_scalar_prefetch=0,
            grid=(M_pad // bm,),
            in_specs=[
                pl.BlockSpec((bm, K), lambda i: (i, 0)),
                pl.BlockSpec((K, N), lambda i: (0, 0)),
                pl.BlockSpec((1, N), lambda i: (0, 0)),
            ],
            out_specs=pl.BlockSpec((bm, N), lambda i: (i, 0)),
        ),
        compiler_params=pltpu.CompilerParams(dimension_semantics=("parallel",)),
    )(x, w, b)
    return out[:M]


# ---------------------------------------------------------------------------
# Recurrent GRU kernel: consumes precomputed input gates gi (B, T, 3H), runs
# T_BLK timesteps per grid iteration, hidden state carried in VMEM scratch.
# ---------------------------------------------------------------------------
def _gru_recurrent_kernel(gi_ref, whh3_ref, bhn_ref, h_out_ref, hstate,
                          *, t_blk, hidden):
    tb = pl.program_id(0)

    @pl.when(tb == 0)
    def _():
        hstate[...] = jnp.zeros_like(hstate)

    H = hidden
    h = hstate[...]                    # (B, H) f32 carry
    whh3 = whh3_ref[...]               # (H, 3H)  fused [W_hr|W_hz|W_hn]^T
    bhn = bhn_ref[...]                 # (1, H)
    gi_blk = gi_ref[...]               # (B, T_BLK, 3H) — one block load

    hs = []
    for s in range(t_blk):             # static unroll over the time block
        gi = gi_blk[:, s, :]                                               # (B, 3H)
        gh = jnp.dot(h, whh3, preferred_element_type=jnp.float32)          # (B, 3H)
        # PyTorch GRU cell (b_ir+b_hr, b_iz+b_hz, b_in already folded into gi):
        r = jax.nn.sigmoid(gi[:, :H] + gh[:, :H])
        z = jax.nn.sigmoid(gi[:, H:2 * H] + gh[:, H:2 * H])
        n = jnp.tanh(gi[:, 2 * H:] + r * (gh[:, 2 * H:] + bhn))
        h = (1.0 - z) * n + z * h
        hs.append(h)

    hstate[...] = h
    # Single lane-dense slab store for the whole block.
    h_out_ref[...] = jnp.stack(hs, axis=1).astype(h_out_ref.dtype)


# ---------------------------------------------------------------------------
# Forward
# ---------------------------------------------------------------------------
@jax.jit
def gru_classifier_forward(x, params):
    """x: (batch, seq, input_size) float32. Returns (h, y_hat), each (batch, seq, hidden)."""
    B, T, I = x.shape
    H = params["w_hh"].shape[1]
    x = x.astype(jnp.float32)

    w_ih = params["w_ih"]        # (3H, I) stacked [W_ir; W_iz; W_in]
    w_hh = params["w_hh"]        # (3H, H)
    b_ih = params["b_ih"]        # (3H,)
    b_hh = params["b_hh"]        # (3H,)

    wih3 = w_ih.T                                          # (I, 3H)
    whh3 = w_hh.T                                          # (H, 3H)
    # Fold b_ir+b_hr and b_iz+b_hz into the input projection bias; keep b_hn separate
    # (it sits inside the r * (h W_hn^T + b_hn) term).
    bi3 = jnp.concatenate([b_ih[:H] + b_hh[:H],
                           b_ih[H:2 * H] + b_hh[H:2 * H],
                           b_ih[2 * H:]]).reshape(1, 3 * H)
    bhn = b_hh[2 * H:].reshape(1, H)
    we = params["w_est"].T                                 # (H, H)
    be = params["b_est"].reshape(1, H)                     # (1, H)

    # ---- 1. Hoisted input projection: one big matmul over all timesteps ----
    gi = _dense(x.reshape(B * T, I), wih3, bi3).reshape(B, T, 3 * H)

    # ---- 2. Sequential recurrence, T_BLK timesteps per grid step ----
    if T <= 32:
        t_blk = T
        T_pad = T
    else:
        t_blk = 32                      # multiple of 8 -> valid sublane block dim
        T_pad = -(-T // t_blk) * t_blk
    if T_pad != T:
        gi = jnp.pad(gi, ((0, 0), (0, T_pad - T), (0, 0)))

    kernel = functools.partial(_gru_recurrent_kernel, t_blk=t_blk, hidden=H)
    h_full = pl.pallas_call(
        kernel,
        out_shape=jax.ShapeDtypeStruct((B, T_pad, H), jnp.float32),
        grid_spec=pltpu.PrefetchScalarGridSpec(
            num_scalar_prefetch=0,
            grid=(T_pad // t_blk,),
            in_specs=[
                pl.BlockSpec((B, t_blk, 3 * H), lambda tb: (0, tb, 0)),   # gi block
                pl.BlockSpec((H, 3 * H), lambda tb: (0, 0)),              # fused W_hh
                pl.BlockSpec((1, H), lambda tb: (0, 0)),                  # b_hn
            ],
            out_specs=pl.BlockSpec((B, t_blk, H), lambda tb: (0, tb, 0)),
            scratch_shapes=[pltpu.VMEM((B, H), jnp.float32)],             # hidden carry
        ),
        compiler_params=pltpu.CompilerParams(
            dimension_semantics=("arbitrary",)),   # serial recurrence over time blocks
    )(gi, whh3, bhn)
    h = h_full[:, :T, :]                                   # (B, T, H)

    # ---- 3. Hoisted estimation head: one big matmul ----
    y_hat = _dense(h.reshape(B * T, H), we, be).reshape(B, T, H)

    # PyTorch forward does h.squeeze(0); with batch > 1 this is a no-op.
    # TODO(synk): for v7x, shard the batch across the two TensorCores (parallel leading axis).
    return h, y_hat


# ---------------------------------------------------------------------------
# Pure-JAX reference of the PyTorch module (for the correctness check).
# ---------------------------------------------------------------------------
def _reference_forward(x, params):
    B, T, I = x.shape
    H = params["w_hh"].shape[1]
    w_ih, w_hh, b_ih, b_hh = params["w_ih"], params["w_hh"], params["b_ih"], params["b_hh"]

    def step(h_prev, x_t):
        gi = x_t @ w_ih.T + b_ih
        gh = h_prev @ w_hh.T + b_hh
        r = jax.nn.sigmoid(gi[:, :H] + gh[:, :H])
        z = jax.nn.sigmoid(gi[:, H:2 * H] + gh[:, H:2 * H])
        n = jnp.tanh(gi[:, 2 * H:] + r * gh[:, 2 * H:])
        h = (1.0 - z) * n + z * h_prev
        return h, h

    h0 = jnp.zeros((B, H), jnp.float32)
    _, hs = jax.lax.scan(step, h0, jnp.transpose(x, (1, 0, 2)))
    h = jnp.transpose(hs, (1, 0, 2))
    y = h @ params["w_est"].T + params["b_est"]
    return h, y


def init_params(key, input_size, hidden_size):
    ks = jax.random.split(key, 6)
    k = 1.0 / jnp.sqrt(hidden_size)
    u = lambda kk, shape: jax.random.uniform(kk, shape, jnp.float32, -k, k)
    return {
        "w_ih": u(ks[0], (3 * hidden_size, input_size)),
        "w_hh": u(ks[1], (3 * hidden_size, hidden_size)),
        "b_ih": u(ks[2], (3 * hidden_size,)),
        "b_hh": u(ks[3], (3 * hidden_size,)),
        "w_est": u(ks[4], (hidden_size, hidden_size)),
        "b_est": u(ks[5], (hidden_size,)),
    }


if __name__ == "__main__":
    batch, seq, input_size, hidden_size = 2, 8, 16, 32

    key = jax.random.PRNGKey(0)
    kx, kp = jax.random.split(key)
    x = jax.random.normal(kx, (batch, seq, input_size), jnp.float32)
    params = init_params(kp, input_size, hidden_size)

    h, y_hat = gru_classifier_forward(x, params)
    jax.block_until_ready((h, y_hat))

    h_ref, y_ref = _reference_forward(x, params)
    assert h.shape == (batch, seq, hidden_size)
    assert y_hat.shape == (batch, seq, hidden_size)
    assert jnp.allclose(h, h_ref, atol=1e-5, rtol=1e-5)
    assert jnp.allclose(y_hat, y_ref, atol=1e-5, rtol=1e-5)

    print("KERNEL_OK")
</pallas_src>

<mosaic_0001>
module attributes {stable_mosaic.version = 11 : i64} {
  func.func @_gru_recurrent_kernel(%arg0: i32, %arg1: memref<2x8x96xf32, #tpu.memory_space<vmem>>, %arg2: memref<32x96xf32, #tpu.memory_space<vmem>>, %arg3: memref<1x32xf32, #tpu.memory_space<vmem>>, %arg4: memref<2x8x32xf32, #tpu.memory_space<vmem>>, %arg5: memref<2x32xf32, #tpu.memory_space<vmem>>) attributes {dimension_semantics = [#tpu.dimension_semantics<arbitrary>], iteration_bounds = array<i64: 1>, scalar_prefetch = 0 : i64, scratch_operands = 1 : i64, tpu.core_type = #tpu.core_type<tc>, window_params = [{transform_indices = @transform_0, window_bounds = array<i64: 2, 8, 96>}, {pipeline_mode = #tpu.pipeline_mode<synchronous>, transform_indices = @transform_1, window_bounds = array<i64: 32, 96>}, {pipeline_mode = #tpu.pipeline_mode<synchronous>, transform_indices = @transform_2, window_bounds = array<i64: 1, 32>}, {transform_indices = @transform_3, window_bounds = array<i64: 2, 8, 32>}]} {
    %c0_i32 = arith.constant 0 : i32
    %0 = arith.cmpi eq, %arg0, %c0_i32 : i32
    %1 = arith.extui %0 : i1 to i32
    %c0_i32_0 = arith.constant 0 : i32
    %2 = arith.cmpi ne, %1, %c0_i32_0 : i32
    scf.if %2 {
      %cst_45 = arith.constant 0.000000e+00 : f32
      %266 = vector.broadcast %cst_45 : f32 to vector<2x32xf32>
      %c0_46 = arith.constant 0 : index
      %c0_47 = arith.constant 0 : index
      %267 = vector.load %arg5[%c0_46, %c0_47] : memref<2x32xf32, #tpu.memory_space<vmem>>, vector<2x32xf32>
      tpu.vector_store %arg5[%c0_46, %c0_47], %266 {strides = array<i32>} : memref<2x32xf32, #tpu.memory_space<vmem>>, vector<2x32xf32>,
    } else {
    }
    %c0 = arith.constant 0 : index
    %c0_1 = arith.constant 0 : index
    %3 = vector.load %arg5[%c0, %c0_1] : memref<2x32xf32, #tpu.memory_space<vmem>>, vector<2x32xf32>
    %c0_2 = arith.constant 0 : index
    %c0_3 = arith.constant 0 : index
    %4 = vector.load %arg2[%c0_2, %c0_3] : memref<32x96xf32, #tpu.memory_space<vmem>>, vector<32x96xf32>
    %c0_4 = arith.constant 0 : index
    %c0_5 = arith.constant 0 : index
    %5 = vector.load %arg3[%c0_4, %c0_5] : memref<1x32xf32, #tpu.memory_space<vmem>>, vector<1x32xf32>
    %c0_6 = arith.constant 0 : index
    %c0_7 = arith.constant 0 : index
    %c0_8 = arith.constant 0 : index
    %6 = vector.load %arg1[%c0_6, %c0_7, %c0_8] : memref<2x8x96xf32, #tpu.memory_space<vmem>>, vector<2x8x96xf32>
    %7 = vector.extract_strided_slice %6 {offsets = [0, 0, 0], sizes = [2, 1, 96], strides = [1, 1, 1]} : vector<2x8x96xf32> to vector<2x1x96xf32>
    %8 = vector.shape_cast %7 : vector<2x1x96xf32> to vector<2x96xf32>
    %cst = arith.constant dense<0.000000e+00> : vector<2x96xf32>
    %9 = tpu.matmul %3, %4, %cst {dimension_numbers = #tpu.dot_dimension_numbers<[1], [0], [0], [1], [0, 0, 1, 1], [], []>} : vector<2x32xf32>, vector<32x96xf32>, vector<2x96xf32> -> vector<2x96xf32>
    %10 = vector.extract_strided_slice %8 {offsets = [0, 0], sizes = [2, 32], strides = [1, 1]} : vector<2x96xf32> to vector<2x32xf32>
    %11 = vector.extract_strided_slice %9 {offsets = [0, 0], sizes = [2, 32], strides = [1, 1]} : vector<2x96xf32> to vector<2x32xf32>
    %12 = arith.addf %10, %11 : vector<2x32xf32>
    %13 = arith.negf %12 : vector<2x32xf32>
    %14 = math.exp %13 : vector<2x32xf32>
    %cst_9 = arith.constant 1.000000e+00 : f32
    %15 = vector.broadcast %cst_9 : f32 to vector<2x32xf32>
    %16 = arith.addf %15, %14 : vector<2x32xf32>
    %17 = arith.divf %15, %16 : vector<2x32xf32>
    %18 = vector.extract_strided_slice %8 {offsets = [0, 32], sizes = [2, 32], strides = [1, 1]} : vector<2x96xf32> to vector<2x32xf32>
    %19 = vector.extract_strided_slice %9 {offsets = [0, 32], sizes = [2, 32], strides = [1, 1]} : vector<2x96xf32> to vector<2x32xf32>
    %20 = arith.addf %18, %19 : vector<2x32xf32>
    %21 = arith.negf %20 : vector<2x32xf32>
    %22 = math.exp %21 : vector<2x32xf32>
    %cst_10 = arith.constant 1.000000e+00 : f32
    %23 = vector.broadcast %cst_10 : f32 to vector<2x32xf32>
    %24 = arith.addf %23, %22 : vector<2x32xf32>
    %25 = arith.divf %23, %24 : vector<2x32xf32>
    %26 = vector.extract_strided_slice %8 {offsets = [0, 64], sizes = [2, 32], strides = [1, 1]} : vector<2x96xf32> to vector<2x32xf32>
    %27 = vector.extract_strided_slice %9 {offsets = [0, 64], sizes = [2, 32], strides = [1, 1]} : vector<2x96xf32> to vector<2x32xf32>
    %28 = vector.broadcast %5 : vector<1x32xf32> to vector<2x32xf32>
    %29 = arith.addf %27, %28 : vector<2x32xf32>
    %30 = arith.mulf %17, %29 : vector<2x32xf32>
    %31 = arith.addf %26, %30 : vector<2x32xf32>
    %32 = math.tanh %31 : vector<2x32xf32>
    %cst_11 = arith.constant 1.000000e+00 : f32
    %33 = vector.broadcast %cst_11 : f32 to vector<2x32xf32>
    %34 = arith.subf %33, %25 : vector<2x32xf32>
    %35 = arith.mulf %34, %32 : vector<2x32xf32>
    %36 = arith.mulf %25, %3 : vector<2x32xf32>
    %37 = arith.addf %35, %36 : vector<2x32xf32>
    %38 = vector.extract_strided_slice %6 {offsets = [0, 1, 0], sizes = [2, 1, 96], strides = [1, 1, 1]} : vector<2x8x96xf32> to vector<2x1x96xf32>
    %39 = vector.shape_cast %38 : vector<2x1x96xf32> to vector<2x96xf32>
    %cst_12 = arith.constant dense<0.000000e+00> : vector<2x96xf32>
    %40 = tpu.matmul %37, %4, %cst_12 {dimension_numbers = #tpu.dot_dimension_numbers<[1], [0], [0], [1], [0, 0, 1, 1], [], []>} : vector<2x32xf32>, vector<32x96xf32>, vector<2x96xf32> -> vector<2x96xf32>
    %41 = vector.extract_strided_slice %39 {offsets = [0, 0], sizes = [2, 32], strides = [1, 1]} : vector<2x96xf32> to vector<2x32xf32>
    %42 = vector.extract_strided_slice %40 {offsets = [0, 0], sizes = [2, 32], strides = [1, 1]} : vector<2x96xf32> to vector<2x32xf32>
    %43 = arith.addf %41, %42 : vector<2x32xf32>
    %44 = arith.negf %43 : vector<2x32xf32>
    %45 = math.exp %44 : vector<2x32xf32>
    %cst_13 = arith.constant 1.000000e+00 : f32
    %46 = vector.broadcast %cst_13 : f32 to vector<2x32xf32>
    %47 = arith.addf %46, %45 : vector<2x32xf32>
    %48 = arith.divf %46, %47 : vector<2x32xf32>
    %49 = vector.extract_strided_slice %39 {offsets = [0, 32], sizes = [2, 32], strides = [1, 1]} : vector<2x96xf32> to vector<2x32xf32>
    %50 = vector.extract_strided_slice %40 {offsets = [0, 32], sizes = [2, 32], strides = [1, 1]} : vector<2x96xf32> to vector<2x32xf32>
    %51 = arith.addf %49, %50 : vector<2x32xf32>
    %52 = arith.negf %51 : vector<2x32xf32>
    %53 = math.exp %52 : vector<2x32xf32>
    %cst_14 = arith.constant 1.000000e+00 : f32
    %54 = vector.broadcast %cst_14 : f32 to vector<2x32xf32>
    %55 = arith.addf %54, %53 : vector<2x32xf32>
    %56 = arith.divf %54, %55 : vector<2x32xf32>
    %57 = vector.extract_strided_slice %39 {offsets = [0, 64], sizes = [2, 32], strides = [1, 1]} : vector<2x96xf32> to vector<2x32xf32>
    %58 = vector.extract_strided_slice %40 {offsets = [0, 64], sizes = [2, 32], strides = [1, 1]} : vector<2x96xf32> to vector<2x32xf32>
    %59 = vector.broadcast %5 : vector<1x32xf32> to vector<2x32xf32>
    %60 = arith.addf %58, %59 : vector<2x32xf32>
    %61 = arith.mulf %48, %60 : vector<2x32xf32>
    %62 = arith.addf %57, %61 : vector<2x32xf32>
    %63 = math.tanh %62 : vector<2x32xf32>
    %cst_15 = arith.constant 1.000000e+00 : f32
    %64 = vector.broadcast %cst_15 : f32 to vector<2x32xf32>
    %65 = arith.subf %64, %56 : vector<2x32xf32>
    %66 = arith.mulf %65, %63 : vector<2x32xf32>
    %67 = arith.mulf %56, %37 : vector<2x32xf32>
    %68 = arith.addf %66, %67 : vector<2x32xf32>
    %69 = vector.extract_strided_slice %6 {offsets = [0, 2, 0], sizes = [2, 1, 96], strides = [1, 1, 1]} : vector<2x8x96xf32> to vector<2x1x96xf32>
    %70 = vector.shape_cast %69 : vector<2x1x96xf32> to vector<2x96xf32>
    %cst_16 = arith.constant dense<0.000000e+00> : vector<2x96xf32>
    %71 = tpu.matmul %68, %4, %cst_16 {dimension_numbers = #tpu.dot_dimension_numbers<[1], [0], [0], [1], [0, 0, 1, 1], [], []>} : vector<2x32xf32>, vector<32x96xf32>, vector<2x96xf32> -> vector<2x96xf32>
    %72 = vector.extract_strided_slice %70 {offsets = [0, 0], sizes = [2, 32], strides = [1, 1]} : vector<2x96xf32> to vector<2x32xf32>
    %73 = vector.extract_strided_slice %71 {offsets = [0, 0], sizes = [2, 32], strides = [1, 1]} : vector<2x96xf32> to vector<2x32xf32>
    %74 = arith.addf %72, %73 : vector<2x32xf32>
    %75 = arith.negf %74 : vector<2x32xf32>
    %76 = math.exp %75 : vector<2x32xf32>
    %cst_17 = arith.constant 1.000000e+00 : f32
    %77 = vector.broadcast %cst_17 : f32 to vector<2x32xf32>
    %78 = arith.addf %77, %76 : vector<2x32xf32>
    %79 = arith.divf %77, %78 : vector<2x32xf32>
    %80 = vector.extract_strided_slice %70 {offsets = [0, 32], sizes = [2, 32], strides = [1, 1]} : vector<2x96xf32> to vector<2x32xf32>
    %81 = vector.extract_strided_slice %71 {offsets = [0, 32], sizes = [2, 32], strides = [1, 1]} : vector<2x96xf32> to vector<2x32xf32>
    %82 = arith.addf %80, %81 : vector<2x32xf32>
    %83 = arith.negf %82 : vector<2x32xf32>
    %84 = math.exp %83 : vector<2x32xf32>
    %cst_18 = arith.constant 1.000000e+00 : f32
    %85 = vector.broadcast %cst_18 : f32 to vector<2x32xf32>
    %86 = arith.addf %85, %84 : vector<2x32xf32>
    %87 = arith.divf %85, %86 : vector<2x32xf32>
    %88 = vector.extract_strided_slice %70 {offsets = [0, 64], sizes = [2, 32], strides = [1, 1]} : vector<2x96xf32> to vector<2x32xf32>
    %89 = vector.extract_strided_slice %71 {offsets = [0, 64], sizes = [2, 32], strides = [1, 1]} : vector<2x96xf32> to vector<2x32xf32>
    %90 = vector.broadcast %5 : vector<1x32xf32> to vector<2x32xf32>
    %91 = arith.addf %89, %90 : vector<2x32xf32>
    %92 = arith.mulf %79, %91 : vector<2x32xf32>
    %93 = arith.addf %88, %92 : vector<2x32xf32>
    %94 = math.tanh %93 : vector<2x32xf32>
    %cst_19 = arith.constant 1.000000e+00 : f32
    %95 = vector.broadcast %cst_19 : f32 to vector<2x32xf32>
    %96 = arith.subf %95, %87 : vector<2x32xf32>
    %97 = arith.mulf %96, %94 : vector<2x32xf32>
    %98 = arith.mulf %87, %68 : vector<2x32xf32>
    %99 = arith.addf %97, %98 : vector<2x32xf32>
    %100 = vector.extract_strided_slice %6 {offsets = [0, 3, 0], sizes = [2, 1, 96], strides = [1, 1, 1]} : vector<2x8x96xf32> to vector<2x1x96xf32>
    %101 = vector.shape_cast %100 : vector<2x1x96xf32> to vector<2x96xf32>
    %cst_20 = arith.constant dense<0.000000e+00> : vector<2x96xf32>
    %102 = tpu.matmul %99, %4, %cst_20 {dimension_numbers = #tpu.dot_dimension_numbers<[1], [0], [0], [1], [0, 0, 1, 1], [], []>} : vector<2x32xf32>, vector<32x96xf32>, vector<2x96xf32> -> vector<2x96xf32>
    %103 = vector.extract_strided_slice %101 {offsets = [0, 0], sizes = [2, 32], strides = [1, 1]} : vector<2x96xf32> to vector<2x32xf32>
    %104 = vector.extract_strided_slice %102 {offsets = [0, 0], sizes = [2, 32], strides = [1, 1]} : vector<2x96xf32> to vector<2x32xf32>
    %105 = arith.addf %103, %104 : vector<2x32xf32>
    %106 = arith.negf %105 : vector<2x32xf32>
    %107 = math.exp %106 : vector<2x32xf32>
    %cst_21 = arith.constant 1.000000e+00 : f32
    %108 = vector.broadcast %cst_21 : f32 to vector<2x32xf32>
    %109 = arith.addf %108, %107 : vector<2x32xf32>
    %110 = arith.divf %108, %109 : vector<2x32xf32>
    %111 = vector.extract_strided_slice %101 {offsets = [0, 32], sizes = [2, 32], strides = [1, 1]} : vector<2x96xf32> to vector<2x32xf32>
    %112 = vector.extract_strided_slice %102 {offsets = [0, 32], sizes = [2, 32], strides = [1, 1]} : vector<2x96xf32> to vector<2x32xf32>
    %113 = arith.addf %111, %112 : vector<2x32xf32>
    %114 = arith.negf %113 : vector<2x32xf32>
    %115 = math.exp %114 : vector<2x32xf32>
    %cst_22 = arith.constant 1.000000e+00 : f32
    %116 = vector.broadcast %cst_22 : f32 to vector<2x32xf32>
    %117 = arith.addf %116, %115 : vector<2x32xf32>
    %118 = arith.divf %116, %117 : vector<2x32xf32>
    %119 = vector.extract_strided_slice %101 {offsets = [0, 64], sizes = [2, 32], strides = [1, 1]} : vector<2x96xf32> to vector<2x32xf32>
    %120 = vector.extract_strided_slice %102 {offsets = [0, 64], sizes = [2, 32], strides = [1, 1]} : vector<2x96xf32> to vector<2x32xf32>
    %121 = vector.broadcast %5 : vector<1x32xf32> to vector<2x32xf32>
    %122 = arith.addf %120, %121 : vector<2x32xf32>
    %123 = arith.mulf %110, %122 : vector<2x32xf32>
    %124 = arith.addf %119, %123 : vector<2x32xf32>
    %125 = math.tanh %124 : vector<2x32xf32>
    %cst_23 = arith.constant 1.000000e+00 : f32
    %126 = vector.broadcast %cst_23 : f32 to vector<2x32xf32>
    %127 = arith.subf %126, %118 : vector<2x32xf32>
    %128 = arith.mulf %127, %125 : vector<2x32xf32>
    %129 = arith.mulf %118, %99 : vector<2x32xf32>
    %130 = arith.addf %128, %129 : vector<2x32xf32>
    %131 = vector.extract_strided_slice %6 {offsets = [0, 4, 0], sizes = [2, 1, 96], strides = [1, 1, 1]} : vector<2x8x96xf32> to vector<2x1x96xf32>
    %132 = vector.shape_cast %131 : vector<2x1x96xf32> to vector<2x96xf32>
    %cst_24 = arith.constant dense<0.000000e+00> : vector<2x96xf32>
    %133 = tpu.matmul %130, %4, %cst_24 {dimension_numbers = #tpu.dot_dimension_numbers<[1], [0], [0], [1], [0, 0, 1, 1], [], []>} : vector<2x32xf32>, vector<32x96xf32>, vector<2x96xf32> -> vector<2x96xf32>
    %134 = vector.extract_strided_slice %132 {offsets = [0, 0], sizes = [2, 32], strides = [1, 1]} : vector<2x96xf32> to vector<2x32xf32>
    %135 = vector.extract_strided_slice %133 {offsets = [0, 0], sizes = [2, 32], strides = [1, 1]} : vector<2x96xf32> to vector<2x32xf32>
    %136 = arith.addf %134, %135 : vector<2x32xf32>
    %137 = arith.negf %136 : vector<2x32xf32>
    %138 = math.exp %137 : vector<2x32xf32>
    %cst_25 = arith.constant 1.000000e+00 : f32
    %139 = vector.broadcast %cst_25 : f32 to vector<2x32xf32>
    %140 = arith.addf %139, %138 : vector<2x32xf32>
    %141 = arith.divf %139, %140 : vector<2x32xf32>
    %142 = vector.extract_strided_slice %132 {offsets = [0, 32], sizes = [2, 32], strides = [1, 1]} : vector<2x96xf32> to vector<2x32xf32>
    %143 = vector.extract_strided_slice %133 {offsets = [0, 32], sizes = [2, 32], strides = [1, 1]} : vector<2x96xf32> to vector<2x32xf32>
    %144 = arith.addf %142, %143 : vector<2x32xf32>
    %145 = arith.negf %144 : vector<2x32xf32>
    %146 = math.exp %145 : vector<2x32xf32>
    %cst_26 = arith.constant 1.000000e+00 : f32
    %147 = vector.broadcast %cst_26 : f32 to vector<2x32xf32>
    %148 = arith.addf %147, %146 : vector<2x32xf32>
    %149 = arith.divf %147, %148 : vector<2x32xf32>
    %150 = vector.extract_strided_slice %132 {offsets = [0, 64], sizes = [2, 32], strides = [1, 1]} : vector<2x96xf32> to vector<2x32xf32>
    %151 = vector.extract_strided_slice %133 {offsets = [0, 64], sizes = [2, 32], strides = [1, 1]} : vector<2x96xf32> to vector<2x32xf32>
    %152 = vector.broadcast %5 : vector<1x32xf32> to vector<2x32xf32>
    %153 = arith.addf %151, %152 : vector<2x32xf32>
    %154 = arith.mulf %141, %153 : vector<2x32xf32>
    %155 = arith.addf %150, %154 : vector<2x32xf32>
    %156 = math.tanh %155 : vector<2x32xf32>
    %cst_27 = arith.constant 1.000000e+00 : f32
    %157 = vector.broadcast %cst_27 : f32 to vector<2x32xf32>
    %158 = arith.subf %157, %149 : vector<2x32xf32>
    %159 = arith.mulf %158, %156 : vector<2x32xf32>
    %160 = arith.mulf %149, %130 : vector<2x32xf32>
    %161 = arith.addf %159, %160 : vector<2x32xf32>
    %162 = vector.extract_strided_slice %6 {offsets = [0, 5, 0], sizes = [2, 1, 96], strides = [1, 1, 1]} : vector<2x8x96xf32> to vector<2x1x96xf32>
    %163 = vector.shape_cast %162 : vector<2x1x96xf32> to vector<2x96xf32>
    %cst_28 = arith.constant dense<0.000000e+00> : vector<2x96xf32>
    %164 = tpu.matmul %161, %4, %cst_28 {dimension_numbers = #tpu.dot_dimension_numbers<[1], [0], [0], [1], [0, 0, 1, 1], [], []>} : vector<2x32xf32>, vector<32x96xf32>, vector<2x96xf32> -> vector<2x96xf32>
    %165 = vector.extract_strided_slice %163 {offsets = [0, 0], sizes = [2, 32], strides = [1, 1]} : vector<2x96xf32> to vector<2x32xf32>
    %166 = vector.extract_strided_slice %164 {offsets = [0, 0], sizes = [2, 32], strides = [1, 1]} : vector<2x96xf32> to vector<2x32xf32>
    %167 = arith.addf %165, %166 : vector<2x32xf32>
    %168 = arith.negf %167 : vector<2x32xf32>
    %169 = math.exp %168 : vector<2x32xf32>
    %cst_29 = arith.constant 1.000000e+00 : f32
    %170 = vector.broadcast %cst_29 : f32 to vector<2x32xf32>
    %171 = arith.addf %170, %169 : vector<2x32xf32>
    %172 = arith.divf %170, %171 : vector<2x32xf32>
    %173 = vector.extract_strided_slice %163 {offsets = [0, 32], sizes = [2, 32], strides = [1, 1]} : vector<2x96xf32> to vector<2x32xf32>
    %174 = vector.extract_strided_slice %164 {offsets = [0, 32], sizes = [2, 32], strides = [1, 1]} : vector<2x96xf32> to vector<2x32xf32>
    %175 = arith.addf %173, %174 : vector<2x32xf32>
    %176 = arith.negf %175 : vector<2x32xf32>
    %177 = math.exp %176 : vector<2x32xf32>
    %cst_30 = arith.constant 1.000000e+00 : f32
    %178 = vector.broadcast %cst_30 : f32 to vector<2x32xf32>
    %179 = arith.addf %178, %177 : vector<2x32xf32>
    %180 = arith.divf %178, %179 : vector<2x32xf32>
    %181 = vector.extract_strided_slice %163 {offsets = [0, 64], sizes = [2, 32], strides = [1, 1]} : vector<2x96xf32> to vector<2x32xf32>
    %182 = vector.extract_strided_slice %164 {offsets = [0, 64], sizes = [2, 32], strides = [1, 1]} : vector<2x96xf32> to vector<2x32xf32>
    %183 = vector.broadcast %5 : vector<1x32xf32> to vector<2x32xf32>
    %184 = arith.addf %182, %183 : vector<2x32xf32>
    %185 = arith.mulf %172, %184 : vector<2x32xf32>
    %186 = arith.addf %181, %185 : vector<2x32xf32>
    %187 = math.tanh %186 : vector<2x32xf32>
    %cst_31 = arith.constant 1.000000e+00 : f32
    %188 = vector.broadcast %cst_31 : f32 to vector<2x32xf32>
    %189 = arith.subf %188, %180 : vector<2x32xf32>
    %190 = arith.mulf %189, %187 : vector<2x32xf32>
    %191 = arith.mulf %180, %161 : vector<2x32xf32>
    %192 = arith.addf %190, %191 : vector<2x32xf32>
    %193 = vector.extract_strided_slice %6 {offsets = [0, 6, 0], sizes = [2, 1, 96], strides = [1, 1, 1]} : vector<2x8x96xf32> to vector<2x1x96xf32>
    %194 = vector.shape_cast %193 : vector<2x1x96xf32> to vector<2x96xf32>
    %cst_32 = arith.constant dense<0.000000e+00> : vector<2x96xf32>
    %195 = tpu.matmul %192, %4, %cst_32 {dimension_numbers = #tpu.dot_dimension_numbers<[1], [0], [0], [1], [0, 0, 1, 1], [], []>} : vector<2x32xf32>, vector<32x96xf32>, vector<2x96xf32> -> vector<2x96xf32>
    %196 = vector.extract_strided_slice %194 {offsets = [0, 0], sizes = [2, 32], strides = [1, 1]} : vector<2x96xf32> to vector<2x32xf32>
    %197 = vector.extract_strided_slice %195 {offsets = [0, 0], sizes = [2, 32], strides = [1, 1]} : vector<2x96xf32> to vector<2x32xf32>
    %198 = arith.addf %196, %197 : vector<2x32xf32>
    %199 = arith.negf %198 : vector<2x32xf32>
    %200 = math.exp %199 : vector<2x32xf32>
    %cst_33 = arith.constant 1.000000e+00 : f32
    %201 = vector.broadcast %cst_33 : f32 to vector<2x32xf32>
    %202 = arith.addf %201, %200 : vector<2x32xf32>
    %203 = arith.divf %201, %202 : vector<2x32xf32>
    %204 = vector.extract_strided_slice %194 {offsets = [0, 32], sizes = [2, 32], strides = [1, 1]} : vector<2x96xf32> to vector<2x32xf32>
    %205 = vector.extract_strided_slice %195 {offsets = [0, 32], sizes = [2, 32], strides = [1, 1]} : vector<2x96xf32> to vector<2x32xf32>
    %206 = arith.addf %204, %205 : vector<2x32xf32>
    %207 = arith.negf %206 : vector<2x32xf32>
    %208 = math.exp %207 : vector<2x32xf32>
    %cst_34 = arith.constant 1.000000e+00 : f32
    %209 = vector.broadcast %cst_34 : f32 to vector<2x32xf32>
    %210 = arith.addf %209, %208 : vector<2x32xf32>
    %211 = arith.divf %209, %210 : vector<2x32xf32>
    %212 = vector.extract_strided_slice %194 {offsets = [0, 64], sizes = [2, 32], strides = [1, 1]} : vector<2x96xf32> to vector<2x32xf32>
    %213 = vector.extract_strided_slice %195 {offsets = [0, 64], sizes = [2, 32], strides = [1, 1]} : vector<2x96xf32> to vector<2x32xf32>
    %214 = vector.broadcast %5 : vector<1x32xf32> to vector<2x32xf32>
    %215 = arith.addf %213, %214 : vector<2x32xf32>
    %216 = arith.mulf %203, %215 : vector<2x32xf32>
    %217 = arith.addf %212, %216 : vector<2x32xf32>
    %218 = math.tanh %217 : vector<2x32xf32>
    %cst_35 = arith.constant 1.000000e+00 : f32
    %219 = vector.broadcast %cst_35 : f32 to vector<2x32xf32>
    %220 = arith.subf %219, %211 : vector<2x32xf32>
    %221 = arith.mulf %220, %218 : vector<2x32xf32>
    %222 = arith.mulf %211, %192 : vector<2x32xf32>
    %223 = arith.addf %221, %222 : vector<2x32xf32>
    %224 = vector.extract_strided_slice %6 {offsets = [0, 7, 0], sizes = [2, 1, 96], strides = [1, 1, 1]} : vector<2x8x96xf32> to vector<2x1x96xf32>
    %225 = vector.shape_cast %224 : vector<2x1x96xf32> to vector<2x96xf32>
    %cst_36 = arith.constant dense<0.000000e+00> : vector<2x96xf32>
    %226 = tpu.matmul %223, %4, %cst_36 {dimension_numbers = #tpu.dot_dimension_numbers<[1], [0], [0], [1], [0, 0, 1, 1], [], []>} : vector<2x32xf32>, vector<32x96xf32>, vector<2x96xf32> -> vector<2x96xf32>
    %227 = vector.extract_strided_slice %225 {offsets = [0, 0], sizes = [2, 32], strides = [1, 1]} : vector<2x96xf32> to vector<2x32xf32>
    %228 = vector.extract_strided_slice %226 {offsets = [0, 0], sizes = [2, 32], strides = [1, 1]} : vector<2x96xf32> to vector<2x32xf32>
    %229 = arith.addf %227, %228 : vector<2x32xf32>
    %230 = arith.negf %229 : vector<2x32xf32>
    %231 = math.exp %230 : vector<2x32xf32>
    %cst_37 = arith.constant 1.000000e+00 : f32
    %232 = vector.broadcast %cst_37 : f32 to vector<2x32xf32>
    %233 = arith.addf %232, %231 : vector<2x32xf32>
    %234 = arith.divf %232, %233 : vector<2x32xf32>
    %235 = vector.extract_strided_slice %225 {offsets = [0, 32], sizes = [2, 32], strides = [1, 1]} : vector<2x96xf32> to vector<2x32xf32>
    %236 = vector.extract_strided_slice %226 {offsets = [0, 32], sizes = [2, 32], strides = [1, 1]} : vector<2x96xf32> to vector<2x32xf32>
    %237 = arith.addf %235, %236 : vector<2x32xf32>
    %238 = arith.negf %237 : vector<2x32xf32>
    %239 = math.exp %238 : vector<2x32xf32>
    %cst_38 = arith.constant 1.000000e+00 : f32
    %240 = vector.broadcast %cst_38 : f32 to vector<2x32xf32>
    %241 = arith.addf %240, %239 : vector<2x32xf32>
    %242 = arith.divf %240, %241 : vector<2x32xf32>
    %243 = vector.extract_strided_slice %225 {offsets = [0, 64], sizes = [2, 32], strides = [1, 1]} : vector<2x96xf32> to vector<2x32xf32>
    %244 = vector.extract_strided_slice %226 {offsets = [0, 64], sizes = [2, 32], strides = [1, 1]} : vector<2x96xf32> to vector<2x32xf32>
    %245 = vector.broadcast %5 : vector<1x32xf32> to vector<2x32xf32>
    %246 = arith.addf %244, %245 : vector<2x32xf32>
    %247 = arith.mulf %234, %246 : vector<2x32xf32>
    %248 = arith.addf %243, %247 : vector<2x32xf32>
    %249 = math.tanh %248 : vector<2x32xf32>
    %cst_39 = arith.constant 1.000000e+00 : f32
    %250 = vector.broadcast %cst_39 : f32 to vector<2x32xf32>
    %251 = arith.subf %250, %242 : vector<2x32xf32>
    %252 = arith.mulf %251, %249 : vector<2x32xf32>
    %253 = arith.mulf %242, %223 : vector<2x32xf32>
    %254 = arith.addf %252, %253 : vector<2x32xf32>
    %c0_40 = arith.constant 0 : index
    %c0_41 = arith.constant 0 : index
    %255 = vector.load %arg5[%c0_40, %c0_41] : memref<2x32xf32, #tpu.memory_space<vmem>>, vector<2x32xf32>
    tpu.vector_store %arg5[%c0_40, %c0_41], %254 {strides = array<i32>} : memref<2x32xf32, #tpu.memory_space<vmem>>, vector<2x32xf32>,
    %256 = vector.shape_cast %37 : vector<2x32xf32> to vector<2x1x32xf32>
    %257 = vector.shape_cast %68 : vector<2x32xf32> to vector<2x1x32xf32>
    %258 = vector.shape_cast %99 : vector<2x32xf32> to vector<2x1x32xf32>
    %259 = vector.shape_cast %130 : vector<2x32xf32> to vector<2x1x32xf32>
    %260 = vector.shape_cast %161 : vector<2x32xf32> to vector<2x1x32xf32>
    %261 = vector.shape_cast %192 : vector<2x32xf32> to vector<2x1x32xf32>
    %262 = vector.shape_cast %223 : vector<2x32xf32> to vector<2x1x32xf32>
    %263 = vector.shape_cast %254 : vector<2x32xf32> to vector<2x1x32xf32>
    %264 = tpu.concatenate %256, %257, %258, %259, %260, %261, %262, %263 in 1 : vector<2x1x32xf32>, vector<2x1x32xf32>, vector<2x1x32xf32>, vector<2x1x32xf32>, vector<2x1x32xf32>, vector<2x1x32xf32>, vector<2x1x32xf32>, vector<2x1x32xf32> -> vector<2x8x32xf32>
    %c0_42 = arith.constant 0 : index
    %c0_43 = arith.constant 0 : index
    %c0_44 = arith.constant 0 : index
    %265 = vector.load %arg4[%c0_42, %c0_43, %c0_44] : memref<2x8x32xf32, #tpu.memory_space<vmem>>, vector<2x8x32xf32>
    tpu.vector_store %arg4[%c0_42, %c0_43, %c0_44], %264 {strides = array<i32>} : memref<2x8x32xf32, #tpu.memory_space<vmem>>, vector<2x8x32xf32>,
    return
  }
  func.func @transform_0(%arg0: i32) -> (i32, i32, i32) {
    %c0_i32 = arith.constant 0 : i32
    %c0_i32_0 = arith.constant 0 : i32
    %c0_i32_1 = arith.constant 0 : i32
    return %c0_i32, %arg0, %c0_i32_0 : i32, i32, i32
  }
  func.func @transform_1(%arg0: i32) -> (i32, i32) {
    %c0_i32 = arith.constant 0 : i32
    %c0_i32_0 = arith.constant 0 : i32
    %c0_i32_1 = arith.constant 0 : i32
    return %c0_i32, %c0_i32_0 : i32, i32
  }
  func.func @transform_2(%arg0: i32) -> (i32, i32) {
    %c0_i32 = arith.constant 0 : i32
    %c0_i32_0 = arith.constant 0 : i32
    %c0_i32_1 = arith.constant 0 : i32
    return %c0_i32, %c0_i32_0 : i32, i32
  }
  func.func @transform_3(%arg0: i32) -> (i32, i32, i32) {
    %c0_i32 = arith.constant 0 : i32
    %c0_i32_0 = arith.constant 0 : i32
    %c0_i32_1 = arith.constant 0 : i32
    return %c0_i32, %arg0, %c0_i32_0 : i32, i32, i32
  }
}

module attributes {stable_mosaic.version = 11 : i64} {
  func.func @_dense_bias_kernel(%arg0: i32, %arg1: memref<16x16xf32, #tpu.memory_space<vmem>>, %arg2: memref<16x96xf32, #tpu.memory_space<vmem>>, %arg3: memref<1x96xf32, #tpu.memory_space<vmem>>, %arg4: memref<16x96xf32, #tpu.memory_space<vmem>>) attributes {dimension_semantics = [#tpu.dimension_semantics<parallel>], iteration_bounds = array<i64: 1>, scalar_prefetch = 0 : i64, scratch_operands = 0 : i64, tpu.core_type = #tpu.core_type<tc>, window_params = [{transform_indices = @transform_0, window_bounds = array<i64: 16, 16>}, {pipeline_mode = #tpu.pipeline_mode<synchronous>, transform_indices = @transform_1, window_bounds = array<i64: 16, 96>}, {pipeline_mode = #tpu.pipeline_mode<synchronous>, transform_indices = @transform_2, window_bounds = array<i64: 1, 96>}, {transform_indices = @transform_3, window_bounds = array<i64: 16, 96>}]} {
    %c0 = arith.constant 0 : index
    %c0_0 = arith.constant 0 : index
    %0 = vector.load %arg1[%c0, %c0_0] : memref<16x16xf32, #tpu.memory_space<vmem>>, vector<16x16xf32>
    %c0_1 = arith.constant 0 : index
    %c0_2 = arith.constant 0 : index
    %1 = vector.load %arg2[%c0_1, %c0_2] : memref<16x96xf32, #tpu.memory_space<vmem>>, vector<16x96xf32>
    %cst = arith.constant dense<0.000000e+00> : vector<16x96xf32>
    %2 = tpu.matmul %0, %1, %cst {dimension_numbers = #tpu.dot_dimension_numbers<[1], [0], [0], [1], [0, 0, 1, 1], [], []>} : vector<16x16xf32>, vector<16x96xf32>, vector<16x96xf32> -> vector<16x96xf32>
    %c0_3 = arith.constant 0 : index
    %c0_4 = arith.constant 0 : index
    %3 = vector.load %arg3[%c0_3, %c0_4] : memref<1x96xf32, #tpu.memory_space<vmem>>, vector<1x96xf32>
    %4 = vector.broadcast %3 : vector<1x96xf32> to vector<16x96xf32>
    %5 = arith.addf %2, %4 : vector<16x96xf32>
    %c0_5 = arith.constant 0 : index
    %c0_6 = arith.constant 0 : index
    %6 = vector.load %arg4[%c0_5, %c0_6] : memref<16x96xf32, #tpu.memory_space<vmem>>, vector<16x96xf32>
    tpu.vector_store %arg4[%c0_5, %c0_6], %5 {strides = array<i32>} : memref<16x96xf32, #tpu.memory_space<vmem>>, vector<16x96xf32>,
    return
  }
  func.func @transform_0(%arg0: i32) -> (i32, i32) {
    %c0_i32 = arith.constant 0 : i32
    %c0_i32_0 = arith.constant 0 : i32
    return %arg0, %c0_i32 : i32, i32
  }
  func.func @transform_1(%arg0: i32) -> (i32, i32) {
    %c0_i32 = arith.constant 0 : i32
    %c0_i32_0 = arith.constant 0 : i32
    %c0_i32_1 = arith.constant 0 : i32
    return %c0_i32, %c0_i32_0 : i32, i32
  }
  func.func @transform_2(%arg0: i32) -> (i32, i32) {
    %c0_i32 = arith.constant 0 : i32
    %c0_i32_0 = arith.constant 0 : i32
    %c0_i32_1 = arith.constant 0 : i32
    return %c0_i32, %c0_i32_0 : i32, i32
  }
  func.func @transform_3(%arg0: i32) -> (i32, i32) {
    %c0_i32 = arith.constant 0 : i32
    %c0_i32_0 = arith.constant 0 : i32
    return %arg0, %c0_i32 : i32, i32
  }
}

module attributes {stable_mosaic.version = 11 : i64} {
  func.func @_dense_bias_kernel(%arg0: i32, %arg1: memref<16x32xf32, #tpu.memory_space<vmem>>, %arg2: memref<32x32xf32, #tpu.memory_space<vmem>>, %arg3: memref<1x32xf32, #tpu.memory_space<vmem>>, %arg4: memref<16x32xf32, #tpu.memory_space<vmem>>) attributes {dimension_semantics = [#tpu.dimension_semantics<parallel>], iteration_bounds = array<i64: 1>, scalar_prefetch = 0 : i64, scratch_operands = 0 : i64, tpu.core_type = #tpu.core_type<tc>, window_params = [{transform_indices = @transform_0, window_bounds = array<i64: 16, 32>}, {pipeline_mode = #tpu.pipeline_mode<synchronous>, transform_indices = @transform_1, window_bounds = array<i64: 32, 32>}, {pipeline_mode = #tpu.pipeline_mode<synchronous>, transform_indices = @transform_2, window_bounds = array<i64: 1, 32>}, {transform_indices = @transform_3, window_bounds = array<i64: 16, 32>}]} {
    %c0 = arith.constant 0 : index
    %c0_0 = arith.constant 0 : index
    %0 = vector.load %arg1[%c0, %c0_0] : memref<16x32xf32, #tpu.memory_space<vmem>>, vector<16x32xf32>
    %c0_1 = arith.constant 0 : index
    %c0_2 = arith.constant 0 : index
    %1 = vector.load %arg2[%c0_1, %c0_2] : memref<32x32xf32, #tpu.memory_space<vmem>>, vector<32x32xf32>
    %cst = arith.constant dense<0.000000e+00> : vector<16x32xf32>
    %2 = tpu.matmul %0, %1, %cst {dimension_numbers = #tpu.dot_dimension_numbers<[1], [0], [0], [1], [0, 0, 1, 1], [], []>} : vector<16x32xf32>, vector<32x32xf32>, vector<16x32xf32> -> vector<16x32xf32>
    %c0_3 = arith.constant 0 : index
    %c0_4 = arith.constant 0 : index
    %3 = vector.load %arg3[%c0_3, %c0_4] : memref<1x32xf32, #tpu.memory_space<vmem>>, vector<1x32xf32>
    %4 = vector.broadcast %3 : vector<1x32xf32> to vector<16x32xf32>
    %5 = arith.addf %2, %4 : vector<16x32xf32>
    %c0_5 = arith.constant 0 : index
    %c0_6 = arith.constant 0 : index
    %6 = vector.load %arg4[%c0_5, %c0_6] : memref<16x32xf32, #tpu.memory_space<vmem>>, vector<16x32xf32>
    tpu.vector_store %arg4[%c0_5, %c0_6], %5 {strides = array<i32>} : memref<16x32xf32, #tpu.memory_space<vmem>>, vector<16x32xf32>,
    return
  }
  func.func @transform_0(%arg0: i32) -> (i32, i32) {
    %c0_i32 = arith.constant 0 : i32
    %c0_i32_0 = arith.constant 0 : i32
    return %arg0, %c0_i32 : i32, i32
  }
  func.func @transform_1(%arg0: i32) -> (i32, i32) {
    %c0_i32 = arith.constant 0 : i32
    %c0_i32_0 = arith.constant 0 : i32
    %c0_i32_1 = arith.constant 0 : i32
    return %c0_i32, %c0_i32_0 : i32, i32
  }
  func.func @transform_2(%arg0: i32) -> (i32, i32) {
    %c0_i32 = arith.constant 0 : i32
    %c0_i32_0 = arith.constant 0 : i32
    %c0_i32_1 = arith.constant 0 : i32
    return %c0_i32, %c0_i32_0 : i32, i32
  }
  func.func @transform_3(%arg0: i32) -> (i32, i32) {
    %c0_i32 = arith.constant 0 : i32
    %c0_i32_0 = arith.constant 0 : i32
    return %arg0, %c0_i32 : i32, i32
  }
}

</mosaic_0001>

<llo_original>
// kernel: gru_classifier_forward.3
$region0: #{gru_classifier_forward.3}
  #allocation0 [shape = 'u32[]', space=smem, size = 0x4, offset = 0x4, fixed_abs, tag = 'smem constant byte address 0x4 - core index']
  #allocation1 [shape = 'u32[144,128]{1,0:T(1,128)}', space=vmem, size = 0x12000, scoped, tag = 'internal scratch']
  %s0 = inlined_call_operand.vmem [shape: f32[16,16], index: 0, kind: input, shape index: {}]
  %s1 = inlined_call_operand.vmem [shape: f32[16,96], index: 1, kind: input, shape index: {}]
  %s2 = inlined_call_operand.vmem [shape: f32[1,96], index: 2, kind: input, shape index: {}]
  %s3 = inlined_call_operand.vmem [shape: f32[16,96], index: 3, kind: output, shape index: {}]
  %s4 = sld [smem:[#allocation0]]
  $region22: #{gru_classifier_forward.3} parent=0
    _
  %s6 = ssub.s32 1, %s4
  %s7 = scalar_select 0, %s6, %s4
  // Predicated region
  $region2: #{gru_classifier_forward.3} parent=0 // pred_check
    _
  $region3: #{gru_classifier_forward.3} parent=0 // pred_check_branch
    %9 = sbr.rel (0) target = $region5
  $region4: #{gru_classifier_forward.3} parent=0 // pred_region
    _
  $region5: #{gru_classifier_forward.3} parent=0 // pred_fallthru
    _
  // Predicated region
  $region6: #{gru_classifier_forward.3} parent=0 // pred_check
    _
  $region7: #{gru_classifier_forward.3} parent=0 // pred_check_branch
    %11 = sbr.rel (0) target = $region9
  $region8: #{gru_classifier_forward.3} parent=0 // pred_region
    _
  $region9: #{gru_classifier_forward.3} parent=0 // pred_fallthru
    _
  // Predicated region
  $region10: #{gru_classifier_forward.3} parent=0 // pred_check
    _
  $region11: #{gru_classifier_forward.3} parent=0 // pred_check_branch
    %13 = sbr.rel (0) target = $region13
  $region12: #{gru_classifier_forward.3} parent=0 // pred_region
    _
  $region13: #{gru_classifier_forward.3} parent=0 // pred_fallthru
    _
  %v14 = vld [vmem:[%s0] sm:$0xff]
  %v15 = vld [vmem:[%s0 + $0x8] sm:$0xff]
  %v16 = vld [vmem:[%s1] sm:$0xff]
  %v17 = vld [vmem:[%s1 + $0x8] sm:$0xff]
  %v18 = vld [vmem:[%s2] sm:$0x1]
  %v20 = vlaneseq
  %v21 = vshrl.u32 %v20, 7
  %v22 = vsub.s32 0, %v21
  %v23 = vrot.slane %v18, %v22
  %vm25 = vcmask 130048
  %v27 = vsel %vm25, %v14, 0
  %v30 = vsel %vm25, %v15, 0
  %32 = vmatprep.subr.mxu0 0.0
  %33 = vmatpush1.msra.mxu0 %v16
  %34 = vmatprep.subr.mxu0 0.0
  %35 = vmatpush1.msra.mxu0 %v17
  %36 = vmatprep.subr.mxu0 0.0
  %37 = vmatpush1.msra.mxu0 0.0
  %38 = vmatprep.subr.mxu0 0.0
  %39 = vmatpush1.msra.mxu0 0.0
  %40 = vmatprep.subr.mxu0 0.0
  %41 = vmatpush1.msra.mxu0 0.0
  %42 = vmatprep.subr.mxu0 0.0
  %43 = vmatpush1.msra.mxu0 0.0
  %44 = vmatprep.subr.mxu0 0.0
  %45 = vmatpush1.msra.mxu0 0.0
  %46 = vmatprep.subr.mxu0 0.0
  %47 = vmatpush1.msra.mxu0 0.0
  %48 = vmatprep.subr.mxu0 0.0
  %49 = vmatpush1.msra.mxu0 0.0
  %50 = vmatprep.subr.mxu0 0.0
  %51 = vmatpush1.msra.mxu0 0.0
  %52 = vmatprep.subr.mxu0 0.0
  %53 = vmatpush1.msra.mxu0 0.0
  %54 = vmatprep.subr.mxu0 0.0
  %55 = vmatpush1.msra.mxu0 0.0
  %56 = vmatprep.subr.mxu0 0.0
  %57 = vmatpush1.msra.mxu0 0.0
  %58 = vmatprep.subr.mxu0 0.0
  %59 = vmatpush1.msra.mxu0 0.0
  %60 = vmatprep.subr.mxu0 0.0
  %61 = vmatpush1.msra.mxu0 0.0
  %62 = vmatprep.subr.mxu0 0.0
  %63 = vmatpush1.msra.mxu0 0.0
  %64 = vmatprep.subr.mxu0 0.0
  %65 = vmatpush1.msra.mxu0 0.0
  %66 = vmatprep.subr.mxu0 0.0
  %67 = vmatpush1.msra.mxu0 0.0
  %68 = vmatprep.subr.mxu0 0.0
  %69 = vmatpush1.msra.mxu0 0.0
  %70 = vmatprep.subr.mxu0 0.0
  %71 = vmatpush1.msra.mxu0 0.0
  %72 = vmatprep.subr.mxu0 0.0
  %73 = vmatpush1.msra.mxu0 0.0
  %74 = vmatprep.subr.mxu0 0.0
  %75 = vmatpush1.msra.mxu0 0.0
  %76 = vmatprep.subr.mxu0 0.0
  %77 = vmatpush1.msra.mxu0 0.0
  %78 = vmatprep.subr.mxu0 0.0
  %79 = vmatpush1.msra.mxu0 0.0
  %80 = vmatprep.subr.mxu0 0.0
  %81 = vmatpush1.msra.mxu0 0.0
  %82 = vmatprep.subr.mxu0 0.0
  %83 = vmatpush1.msra.mxu0 0.0
  %84 = vmatprep.subr.mxu0 0.0
  %85 = vmatpush1.msra.mxu0 0.0
  %86 = vmatprep.subr.mxu0 0.0
  %87 = vmatpush1.msra.mxu0 0.0
  %88 = vmatprep.subr.mxu0 0.0
  %89 = vmatpush1.msra.mxu0 0.0
  %90 = vmatprep.subr.mxu0 0.0
  %91 = vmatpush1.msra.mxu0 0.0
  %92 = vmatprep.subr.mxu0 0.0
  %93 = vmatpush1.msra.mxu0 0.0
  %94 = vmatprep.subr.mxu0 0.0
  %95 = vmatpush1.msra.mxu0 0.0
  %96 = vmatprep.mubr.f32.mxu0 0.0
  %97 = vmatmul.mubr.f32.gmra.mrb[0].mxu0 %v27
  %v98 = vpop.f32.mrb[0].mxu0
  %v99 = vadd.f32 %v23, %v98
  %v100 = vpop.f32.mrb[0].mxu0
  %101 = vmatprep.mubr.f32.mxu0 0.0
  %102 = vmatmul.mubr.f32.gmra.mrb[0].mxu0 %v30
  %v103 = vpop.f32.mrb[0].mxu0
  %v104 = vadd.f32 %v23, %v103
  %v105 = vpop.f32.mrb[0].mxu0
  %106 = vdwg.mxu0
  %vm107 = vcmask 785408
  %108 = vst.msk [vmem:[%s3] sm:$0xff] %vm107, %v99
  %109 = vst.msk [vmem:[%s3 + $0x8] sm:$0xff] %vm107, %v104
  // Predicated region
  $region14: #{gru_classifier_forward.3} parent=0 // pred_check
    _
  $region15: #{gru_classifier_forward.3} parent=0 // pred_check_branch
    %111 = sbr.rel (0) target = $region17
  $region16: #{gru_classifier_forward.3} parent=0 // pred_region
    _
  $region17: #{gru_classifier_forward.3} parent=0 // pred_fallthru
    _
  // Predicated region
  $region18: #{gru_classifier_forward.3} parent=0 // pred_check
    _
  $region19: #{gru_classifier_forward.3} parent=0 // pred_check_branch
    %113 = sbr.rel (0) target = $region21
  $region20: #{gru_classifier_forward.3} parent=0 // pred_region
    _
  $region21: #{gru_classifier_forward.3} parent=0 // pred_fallthru
    _

// kernel: gru_classifier_forward.5
$region0: #{gru_classifier_forward.5}
  #allocation0 [shape = 'u32[]', space=smem, size = 0x4, offset = 0x4, fixed_abs, tag = 'smem constant byte address 0x4 - core index']
  #allocation1 [shape = 'u32[144,128]{1,0:T(1,128)}', space=vmem, size = 0x12000, scoped, tag = 'internal scratch']
  %s0 = inlined_call_operand.vmem [shape: f32[16,32], index: 0, kind: input, shape index: {}]
  %s1 = inlined_call_operand.vmem [shape: f32[32,32], index: 1, kind: input, shape index: {}]
  %s2 = inlined_call_operand.vmem [shape: f32[1,32], index: 2, kind: input, shape index: {}]
  %s3 = inlined_call_operand.hbm [shape: f32[16,32], index: 3, kind: output, shape index: {}]
  %s4 = sld [smem:[#allocation0]]
  $region22: #{gru_classifier_forward.5} parent=0
    _
  %s6 = ssub.s32 1, %s4
  %s7 = scalar_select 0, %s6, %s4
  $region1: #{gru_classifier_forward.5} parent=0
    #allocation2 [shape = 'u8[8192]{0}', space=vmem, size = 0x2000, scoped, tag = 'output window, operand 0, single buffered']
    #allocation3 [shape = 's32[1]{0}', space=sflag, size = 0x4, scoped, tag = 'scoped memory for gru_classifier_forward.5']
    %8 = vsyncpa [#allocation3], 0
    // Predicated region
    $region2: #{gru_classifier_forward.5} parent=1 // pred_check
      _
    $region3: #{gru_classifier_forward.5} parent=1 // pred_check_branch
      %10 = sbr.rel (0) target = $region5
    $region4: #{gru_classifier_forward.5} parent=1 // pred_region
      _
    $region5: #{gru_classifier_forward.5} parent=1 // pred_fallthru
      _
    // Predicated region
    $region6: #{gru_classifier_forward.5} parent=1 // pred_check
      _
    $region7: #{gru_classifier_forward.5} parent=1 // pred_check_branch
      %12 = sbr.rel (0) target = $region9
    $region8: #{gru_classifier_forward.5} parent=1 // pred_region
      _
    $region9: #{gru_classifier_forward.5} parent=1 // pred_fallthru
      _
    // Predicated region
    $region10: #{gru_classifier_forward.5} parent=1 // pred_check
      _
    $region11: #{gru_classifier_forward.5} parent=1 // pred_check_branch
      %14 = sbr.rel (0) target = $region13
    $region12: #{gru_classifier_forward.5} parent=1 // pred_region
      _
    $region13: #{gru_classifier_forward.5} parent=1 // pred_fallthru
      _
    %v15 = vld [vmem:[%s0] sm:$0xff]
    %v16 = vld [vmem:[%s0 + $0x8] sm:$0xff]
    %v17 = vld [vmem:[%s1] sm:$0xff]
    %v18 = vld [vmem:[%s1 + $0x8] sm:$0xff]
    %v19 = vld [vmem:[%s1 + $0x10] sm:$0xff]
    %v20 = vld [vmem:[%s1 + $0x18] sm:$0xff]
    %v21 = vld [vmem:[%s2] sm:$0x1]
    %v23 = vlaneseq
    %v24 = vshrl.u32 %v23, 7
    %v25 = vsub.s32 0, %v24
    %v26 = vrot.slane %v21, %v25
    %vm28 = vcmask 261120
    %v30 = vsel %vm28, %v15, 0
    %v33 = vsel %vm28, %v16, 0
    %35 = vmatprep.subr.mxu0 0.0
    %36 = vmatpush1.msra.mxu0 %v17
    %37 = vmatprep.subr.mxu0 0.0
    %38 = vmatpush1.msra.mxu0 %v18
    %39 = vmatprep.subr.mxu0 0.0
    %40 = vmatpush1.msra.mxu0 %v19
    %41 = vmatprep.subr.mxu0 0.0
    %42 = vmatpush1.msra.mxu0 %v20
    %43 = vmatprep.subr.mxu0 0.0
    %44 = vmatpush1.msra.mxu0 0.0
    %45 = vmatprep.subr.mxu0 0.0
    %46 = vmatpush1.msra.mxu0 0.0
    %47 = vmatprep.subr.mxu0 0.0
    %48 = vmatpush1.msra.mxu0 0.0
    %49 = vmatprep.subr.mxu0 0.0
    %50 = vmatpush1.msra.mxu0 0.0
    %51 = vmatprep.subr.mxu0 0.0
    %52 = vmatpush1.msra.mxu0 0.0
    %53 = vmatprep.subr.mxu0 0.0
    %54 = vmatpush1.msra.mxu0 0.0
    %55 = vmatprep.subr.mxu0 0.0
    %56 = vmatpush1.msra.mxu0 0.0
    %57 = vmatprep.subr.mxu0 0.0
    %58 = vmatpush1.msra.mxu0 0.0
    %59 = vmatprep.subr.mxu0 0.0
    %60 = vmatpush1.msra.mxu0 0.0
    %61 = vmatprep.subr.mxu0 0.0
    %62 = vmatpush1.msra.mxu0 0.0
    %63 = vmatprep.subr.mxu0 0.0
    %64 = vmatpush1.msra.mxu0 0.0
    %65 = vmatprep.subr.mxu0 0.0
    %66 = vmatpush1.msra.mxu0 0.0
    %67 = vmatprep.subr.mxu0 0.0
    %68 = vmatpush1.msra.mxu0 0.0
    %69 = vmatprep.subr.mxu0 0.0
    %70 = vmatpush1.msra.mxu0 0.0
    %71 = vmatprep.subr.mxu0 0.0
    %72 = vmatpush1.msra.mxu0 0.0
    %73 = vmatprep.subr.mxu0 0.0
    %74 = vmatpush1.msra.mxu0 0.0
    %75 = vmatprep.subr.mxu0 0.0
    %76 = vmatpush1.msra.mxu0 0.0
    %77 = vmatprep.subr.mxu0 0.0
    %78 = vmatpush1.msra.mxu0 0.0
    %79 = vmatprep.subr.mxu0 0.0
    %80 = vmatpush1.msra.mxu0 0.0
    %81 = vmatprep.subr.mxu0 0.0
    %82 = vmatpush1.msra.mxu0 0.0
    %83 = vmatprep.subr.mxu0 0.0
    %84 = vmatpush1.msra.mxu0 0.0
    %85 = vmatprep.subr.mxu0 0.0
    %86 = vmatpush1.msra.mxu0 0.0
    %87 = vmatprep.subr.mxu0 0.0
    %88 = vmatpush1.msra.mxu0 0.0
    %89 = vmatprep.subr.mxu0 0.0
    %90 = vmatpush1.msra.mxu0 0.0
    %91 = vmatprep.subr.mxu0 0.0
    %92 = vmatpush1.msra.mxu0 0.0
    %93 = vmatprep.subr.mxu0 0.0
    %94 = vmatpush1.msra.mxu0 0.0
    %95 = vmatprep.subr.mxu0 0.0
    %96 = vmatpush1.msra.mxu0 0.0
    %97 = vmatprep.subr.mxu0 0.0
    %98 = vmatpush1.msra.mxu0 0.0
    %99 = vmatprep.mubr.f32.mxu0 0.0
    %100 = vmatmul.mubr.f32.gmra.mrb[0].mxu0 %v30
    %v101 = vpop.f32.mrb[0].mxu0
    %v102 = vadd.f32 %v26, %v101
    %v103 = vpop.f32.mrb[0].mxu0
    %104 = vmatprep.mubr.f32.mxu0 0.0
    %105 = vmatmul.mubr.f32.gmra.mrb[0].mxu0 %v33
    %v106 = vpop.f32.mrb[0].mxu0
    %v107 = vadd.f32 %v26, %v106
    %v108 = vpop.f32.mrb[0].mxu0
    %109 = vdwg.mxu0
    %110 = vst.msk [vmem:[#allocation2] sm:$0xff] %vm28, %v102
    %111 = vst.msk [vmem:[#allocation2 + $0x8] sm:$0xff] %vm28, %v107
    // Predicated region
    $region14: #{gru_classifier_forward.5} parent=1 // pred_check
      _
    $region15: #{gru_classifier_forward.5} parent=1 // pred_check_branch
      %113 = sbr.rel (0) target = $region17
    $region16: #{gru_classifier_forward.5} parent=1 // pred_region
      %s115 = ssub.s32 256, 256
      %116 = vsyncadd [#allocation3], %s115
      %s117 = sshll.u32 [#allocation2], 4
      %s118 = int_to_ptr.vmem [resolvable:$true] %s117
      %123 = dma.vmem_to_hbm [thread:$0]  %s118, 256, %s3, [#allocation3], 128, 128, 8
    $region17: #{gru_classifier_forward.5} parent=1 // pred_fallthru
      _
    // Predicated region
    $region18: #{gru_classifier_forward.5} parent=1 // pred_check
      _
    $region19: #{gru_classifier_forward.5} parent=1 // pred_check_branch
      %125 = sbr.rel (0) target = $region21
    $region20: #{gru_classifier_forward.5} parent=1 // pred_region
      %126 = dma.done [#allocation3], 256
    $region21: #{gru_classifier_forward.5} parent=1 // pred_fallthru
      _
    %127 = vsyncpa [#allocation3], 1

// kernel: gru_classifier_forward.4
$region0: #{gru_classifier_forward.4}
  #allocation0 [shape = 'u32[]', space=smem, size = 0x4, offset = 0x4, fixed_abs, tag = 'smem constant byte address 0x4 - core index']
  #allocation1 [shape = 'u32[144,128]{1,0:T(1,128)}', space=vmem, size = 0x12000, scoped, tag = 'internal scratch']
  #allocation2 [shape = 'f32[2,32]{1,0:T(2,128)}', space=vmem, size = 0x400, scoped, tag = 'scratch operand']
  %s0 = inlined_call_operand.vmem [shape: f32[2,8,96], index: 0, kind: input, shape index: {}]
  %s1 = inlined_call_operand.vmem [shape: f32[32,96], index: 1, kind: input, shape index: {}]
  %s2 = inlined_call_operand.vmem [shape: f32[1,32], index: 2, kind: input, shape index: {}]
  %s3 = inlined_call_operand.vmem [shape: f32[2,8,32], index: 3, kind: output, shape index: {}]
  %s4 = sld [smem:[#allocation0]]
  $region26: #{gru_classifier_forward.4} parent=0
    _
  %s6 = ssub.s32 1, %s4
  %s7 = scalar_select 0, %s6, %s4
  // Predicated region
  $region2: #{gru_classifier_forward.4} parent=0 // pred_check
    _
  $region3: #{gru_classifier_forward.4} parent=0 // pred_check_branch
    %9 = sbr.rel (0) target = $region5
  $region4: #{gru_classifier_forward.4} parent=0 // pred_region
    _
  $region5: #{gru_classifier_forward.4} parent=0 // pred_fallthru
    _
  // Predicated region
  $region6: #{gru_classifier_forward.4} parent=0 // pred_check
    _
  $region7: #{gru_classifier_forward.4} parent=0 // pred_check_branch
    %11 = sbr.rel (0) target = $region9
  $region8: #{gru_classifier_forward.4} parent=0 // pred_region
    _
  $region9: #{gru_classifier_forward.4} parent=0 // pred_fallthru
    _
  // Predicated region
  $region10: #{gru_classifier_forward.4} parent=0 // pred_check
    _
  $region11: #{gru_classifier_forward.4} parent=0 // pred_check_branch
    %13 = sbr.rel (0) target = $region13
  $region12: #{gru_classifier_forward.4} parent=0 // pred_region
    _
  $region13: #{gru_classifier_forward.4} parent=0 // pred_fallthru
    _
  %p14 = scmp.eq.s32.totalorder 0, 0
  // Predicated region
  $region14: #{gru_classifier_forward.4} parent=0 // pred_check
    %p15 = pneg %p14
  $region15: #{gru_classifier_forward.4} parent=0 // pred_check_branch
    %17 = sbr.rel (%p15) target = $region17
  $region16: #{gru_classifier_forward.4} parent=0 // pred_region
    %vm18 = vcmask 254976
    %19 = vst.msk [vmem:[#allocation2] sm:$0x3] %vm18, 0.0
  $region17: #{gru_classifier_forward.4} parent=0 // pred_fallthru
    _
  %v20 = vld [vmem:[#allocation2] sm:$0x3]
  %v21 = vld [vmem:[%s1] sm:$0xff]
  %v22 = vld [vmem:[%s1 + $0x8] sm:$0xff]
  %v23 = vld [vmem:[%s1 + $0x10] sm:$0xff]
  %v24 = vld [vmem:[%s1 + $0x18] sm:$0xff]
  %v25 = vld [vmem:[%s2] sm:$0x1]
  %v26 = vld [vmem:[%s0] sm:$0xff]
  %v27 = vld [vmem:[%s0 + $0x8] sm:$0xff]
  %vm28 = vcmask 261120
  %v30 = vsel %vm28, %v20, 0
  %32 = vmatprep.subr.mxu0 0.0
  %33 = vmatpush1.msra.mxu0 %v21
  %34 = vmatprep.subr.mxu0 0.0
  %35 = vmatpush1.msra.mxu0 %v22
  %36 = vmatprep.subr.mxu0 0.0
  %37 = vmatpush1.msra.mxu0 %v23
  %38 = vmatprep.subr.mxu0 0.0
  %39 = vmatpush1.msra.mxu0 %v24
  %40 = vmatprep.subr.mxu0 0.0
  %41 = vmatpush1.msra.mxu0 0.0
  %42 = vmatprep.subr.mxu0 0.0
  %43 = vmatpush1.msra.mxu0 0.0
  %44 = vmatprep.subr.mxu0 0.0
  %45 = vmatpush1.msra.mxu0 0.0
  %46 = vmatprep.subr.mxu0 0.0
  %47 = vmatpush1.msra.mxu0 0.0
  %48 = vmatprep.subr.mxu0 0.0
  %49 = vmatpush1.msra.mxu0 0.0
  %50 = vmatprep.subr.mxu0 0.0
  %51 = vmatpush1.msra.mxu0 0.0
  %52 = vmatprep.subr.mxu0 0.0
  %53 = vmatpush1.msra.mxu0 0.0
  %54 = vmatprep.subr.mxu0 0.0
  %55 = vmatpush1.msra.mxu0 0.0
  %56 = vmatprep.subr.mxu0 0.0
  %57 = vmatpush1.msra.mxu0 0.0
  %58 = vmatprep.subr.mxu0 0.0
  %59 = vmatpush1.msra.mxu0 0.0
  %60 = vmatprep.subr.mxu0 0.0
  %61 = vmatpush1.msra.mxu0 0.0
  %62 = vmatprep.subr.mxu0 0.0
  %63 = vmatpush1.msra.mxu0 0.0
  %64 = vmatprep.subr.mxu0 0.0
  %65 = vmatpush1.msra.mxu0 0.0
  %66 = vmatprep.subr.mxu0 0.0
  %67 = vmatpush1.msra.mxu0 0.0
  %68 = vmatprep.subr.mxu0 0.0
  %69 = vmatpush1.msra.mxu0 0.0
  %70 = vmatprep.subr.mxu0 0.0
  %71 = vmatpush1.msra.mxu0 0.0
  %72 = vmatprep.subr.mxu0 0.0
  %73 = vmatpush1.msra.mxu0 0.0
  %74 = vmatprep.subr.mxu0 0.0
  %75 = vmatpush1.msra.mxu0 0.0
  %76 = vmatprep.subr.mxu0 0.0
  %77 = vmatpush1.msra.mxu0 0.0
  %78 = vmatprep.subr.mxu0 0.0
  %79 = vmatpush1.msra.mxu0 0.0
  %80 = vmatprep.subr.mxu0 0.0
  %81 = vmatpush1.msra.mxu0 0.0
  %82 = vmatprep.subr.mxu0 0.0
  %83 = vmatpush1.msra.mxu0 0.0
  %84 = vmatprep.subr.mxu0 0.0
  %85 = vmatpush1.msra.mxu0 0.0
  %86 = vmatprep.subr.mxu0 0.0
  %87 = vmatpush1.msra.mxu0 0.0
  %88 = vmatprep.subr.mxu0 0.0
  %89 = vmatpush1.msra.mxu0 0.0
  %90 = vmatprep.subr.mxu0 0.0
  %91 = vmatpush1.msra.mxu0 0.0
  %92 = vmatprep.subr.mxu0 0.0
  %93 = vmatpush1.msra.mxu0 0.0
  %94 = vmatprep.subr.mxu0 0.0
  %95 = vmatpush1.msra.mxu0 0.0
  %96 = vmatprep.mubr.f32.mxu0 0.0
  %97 = vmatmul.mubr.f32.gmra.mrb[0].mxu0 %v30
  %v98 = vpop.f32.mrb[0].mxu0
  %v99 = vadd.f32 0.0, %v98
  %v100 = vpop.f32.mrb[0].mxu0
  %101 = vdwg.mxu0
  %v103 = vrot.slane %v99, 1
  %v106 = vadd.f32 %v26, %v99
  %v107 = vadd.f32 %v27, %v103
  %v108 = vxor.u32 %v106, 2147483648
  %v109 = vxor.u32 %v107, 2147483648
  %v110 = vmul.f32 %v108, 1.442695
  %v111 = vpow.pop %v110
  %v112 = vmul.f32 %v109, 1.442695
  %v113 = vpow.pop %v112
  %v114 = vadd.f32 %v111, 1.0
  %v115 = vadd.f32 %v113, 1.0
  %v116 = vrcp.pop %v114
  %v117 = vmul.f32 1.0, %v116
  %v118 = vrcp.pop %v115
  %v119 = vmul.f32 1.0, %v118
  %v121 = vlaneseq
  %v122 = vshrl.u32 %v121, 7
  %v123 = vsub.s32 0, %v122
  %v124 = vrot.slane %v25, %v123
  %125 = vrot.lane.b32.xlu0 %v124, 64
  %v126 = vpop.permute.xlu0 %125
  %v128 = vadd.f32 %v99, %v126
  %v130 = vrot.slane %v128, 1
  %131 = vrot.lane.b32.xlu0 %v128, 64
  %v132 = vpop.permute.xlu0 %131
  %133 = vrot.lane.b32.xlu0 %v130, 64
  %v134 = vpop.permute.xlu0 %133
  %v137 = vmul.f32 %v117, %v132
  %v138 = vmul.f32 %v119, %v134
  %141 = vrot.lane.b32.xlu0 %v137, 64
  %v142 = vpop.permute.xlu0 %141
  %143 = vrot.lane.b32.xlu0 %v138, 64
  %v144 = vpop.permute.xlu0 %143
  %v147 = vadd.f32 %v26, %v142
  %v148 = vadd.f32 %v27, %v144
  %v149 = vtanh.pop %v147
  %v150 = vtanh.pop %v148
  %v151 = vsub.f32 1.0, %v117
  %v152 = vsub.f32 1.0, %v119
  %155 = vrot.lane.b32.xlu0 %v149, 96
  %v156 = vpop.permute.xlu0 %155
  %157 = vrot.lane.b32.xlu0 %v150, 96
  %v158 = vpop.permute.xlu0 %157
  %v161 = vmul.f32 %v151, %v156
  %v162 = vmul.f32 %v152, %v158
  %v163 = vrot.slane %v20, 1
  %164 = vrot.lane.b32.xlu0 %v20, 32
  %v165 = vpop.permute.xlu0 %164
  %166 = vrot.lane.b32.xlu0 %v163, 32
  %v167 = vpop.permute.xlu0 %166
  %v170 = vmul.f32 %v117, %v165
  %v171 = vmul.f32 %v119, %v167
  %v172 = vadd.f32 %v161, %v170
  %v173 = vadd.f32 %v162, %v171
  %v176 = vrot.slane %v173, 7
  %vm177 = vcmask 1041409
  %v178 = vsel %vm177, %v176, %v172
  %179 = vrot.lane.b32.xlu0 %v178, 96
  %v180 = vpop.permute.xlu0 %179
  %v181 = vsel %vm28, %v180, 0
  %183 = vmatprep.subr.mxu0 0.0
  %184 = vmatpush1.msra.mxu0 %v21
  %185 = vmatprep.subr.mxu0 0.0
  %186 = vmatpush1.msra.mxu0 %v22
  %187 = vmatprep.subr.mxu0 0.0
  %188 = vmatpush1.msra.mxu0 %v23
  %189 = vmatprep.subr.mxu0 0.0
  %190 = vmatpush1.msra.mxu0 %v24
  %191 = vmatprep.subr.mxu0 0.0
  %192 = vmatpush1.msra.mxu0 0.0
  %193 = vmatprep.subr.mxu0 0.0
  %194 = vmatpush1.msra.mxu0 0.0
  %195 = vmatprep.subr.mxu0 0.0
  %196 = vmatpush1.msra.mxu0 0.0
  %197 = vmatprep.subr.mxu0 0.0
  %198 = vmatpush1.msra.mxu0 0.0
  %199 = vmatprep.subr.mxu0 0.0
  %200 = vmatpush1.msra.mxu0 0.0
  %201 = vmatprep.subr.mxu0 0.0
  %202 = vmatpush1.msra.mxu0 0.0
  %203 = vmatprep.subr.mxu0 0.0
  %204 = vmatpush1.msra.mxu0 0.0
  %205 = vmatprep.subr.mxu0 0.0
  %206 = vmatpush1.msra.mxu0 0.0
  %207 = vmatprep.subr.mxu0 0.0
  %208 = vmatpush1.msra.mxu0 0.0
  %209 = vmatprep.subr.mxu0 0.0
  %210 = vmatpush1.msra.mxu0 0.0
  %211 = vmatprep.subr.mxu0 0.0
  %212 = vmatpush1.msra.mxu0 0.0
  %213 = vmatprep.subr.mxu0 0.0
  %214 = vmatpush1.msra.mxu0 0.0
  %215 = vmatprep.subr.mxu0 0.0
  %216 = vmatpush1.msra.mxu0 0.0
  %217 = vmatprep.subr.mxu0 0.0
  %218 = vmatpush1.msra.mxu0 0.0
  %219 = vmatprep.subr.mxu0 0.0
  %220 = vmatpush1.msra.mxu0 0.0
  %221 = vmatprep.subr.mxu0 0.0
  %222 = vmatpush1.msra.mxu0 0.0
  %223 = vmatprep.subr.mxu0 0.0
  %224 = vmatpush1.msra.mxu0 0.0
  %225 = vmatprep.subr.mxu0 0.0
  %226 = vmatpush1.msra.mxu0 0.0
  %227 = vmatprep.subr.mxu0 0.0
  %228 = vmatpush1.msra.mxu0 0.0
  %229 = vmatprep.subr.mxu0 0.0
  %230 = vmatpush1.msra.mxu0 0.0
  %231 = vmatprep.subr.mxu0 0.0
  %232 = vmatpush1.msra.mxu0 0.0
  %233 = vmatprep.subr.mxu0 0.0
  %234 = vmatpush1.msra.mxu0 0.0
  %235 = vmatprep.subr.mxu0 0.0
  %236 = vmatpush1.msra.mxu0 0.0
  %237 = vmatprep.subr.mxu0 0.0
  %238 = vmatpush1.msra.mxu0 0.0
  %239 = vmatprep.subr.mxu0 0.0
  %240 = vmatpush1.msra.mxu0 0.0
  %241 = vmatprep.subr.mxu0 0.0
  %242 = vmatpush1.msra.mxu0 0.0
  %243 = vmatprep.subr.mxu0 0.0
  %244 = vmatpush1.msra.mxu0 0.0
  %245 = vmatprep.subr.mxu0 0.0
  %246 = vmatpush1.msra.mxu0 0.0
  %247 = vmatprep.mubr.f32.mxu0 0.0
  %248 = vmatmul.mubr.f32.gmra.mrb[0].mxu0 %v181
  %v249 = vpop.f32.mrb[0].mxu0
  %v250 = vadd.f32 0.0, %v249
  %v251 = vpop.f32.mrb[0].mxu0
  %252 = vdwg.mxu0
  %v254 = vrot.slane %v250, 7
  %v257 = vadd.f32 %v26, %v254
  %v258 = vadd.f32 %v27, %v250
  %v259 = vxor.u32 %v257, 2147483648
  %v260 = vxor.u32 %v258, 2147483648
  %v261 = vmul.f32 %v259, 1.442695
  %v262 = vpow.pop %v261
  %v263 = vmul.f32 %v260, 1.442695
  %v264 = vpow.pop %v263
  %v265 = vadd.f32 %v262, 1.0
  %v266 = vadd.f32 %v264, 1.0
  %v267 = vrcp.pop %v265
  %v268 = vmul.f32 1.0, %v267
  %v269 = vrcp.pop %v266
  %v270 = vmul.f32 1.0, %v269
  %v271 = vadd.f32 %v250, %v126
  %v273 = vrot.slane %v271, 7
  %274 = vrot.lane.b32.xlu0 %v273, 64
  %v275 = vpop.permute.xlu0 %274
  %276 = vrot.lane.b32.xlu0 %v271, 64
  %v277 = vpop.permute.xlu0 %276
  %v280 = vmul.f32 %v268, %v275
  %v281 = vmul.f32 %v270, %v277
  %284 = vrot.lane.b32.xlu0 %v280, 64
  %v285 = vpop.permute.xlu0 %284
  %286 = vrot.lane.b32.xlu0 %v281, 64
  %v287 = vpop.permute.xlu0 %286
  %v290 = vadd.f32 %v26, %v285
  %v291 = vadd.f32 %v27, %v287
  %v292 = vtanh.pop %v290
  %v293 = vtanh.pop %v291
  %v294 = vsub.f32 1.0, %v268
  %v295 = vsub.f32 1.0, %v270
  %298 = vrot.lane.b32.xlu0 %v292, 96
  %v299 = vpop.permute.xlu0 %298
  %300 = vrot.lane.b32.xlu0 %v293, 96
  %v301 = vpop.permute.xlu0 %300
  %v304 = vmul.f32 %v294, %v299
  %v305 = vmul.f32 %v295, %v301
  %v306 = vrot.slane %v172, 7
  %v309 = vmul.f32 %v268, %v306
  %v310 = vmul.f32 %v270, %v176
  %v311 = vadd.f32 %v304, %v309
  %v312 = vadd.f32 %v305, %v310
  %v315 = vrot.slane %v311, 1
  %v316 = vsel %vm177, %v312, %v315
  %317 = vrot.lane.b32.xlu0 %v316, 96
  %v318 = vpop.permute.xlu0 %317
  %v319 = vsel %vm28, %v318, 0
  %321 = vmatprep.subr.mxu0 0.0
  %322 = vmatpush1.msra.mxu0 %v21
  %323 = vmatprep.subr.mxu0 0.0
  %324 = vmatpush1.msra.mxu0 %v22
  %325 = vmatprep.subr.mxu0 0.0
  %326 = vmatpush1.msra.mxu0 %v23
  %327 = vmatprep.subr.mxu0 0.0
  %328 = vmatpush1.msra.mxu0 %v24
  %329 = vmatprep.subr.mxu0 0.0
  %330 = vmatpush1.msra.mxu0 0.0
  %331 = vmatprep.subr.mxu0 0.0
  %332 = vmatpush1.msra.mxu0 0.0
  %333 = vmatprep.subr.mxu0 0.0
  %334 = vmatpush1.msra.mxu0 0.0
  %335 = vmatprep.subr.mxu0 0.0
  %336 = vmatpush1.msra.mxu0 0.0
  %337 = vmatprep.subr.mxu0 0.0
  %338 = vmatpush1.msra.mxu0 0.0
  %339 = vmatprep.subr.mxu0 0.0
  %340 = vmatpush1.msra.mxu0 0.0
  %341 = vmatprep.subr.mxu0 0.0
  %342 = vmatpush1.msra.mxu0 0.0
  %343 = vmatprep.subr.mxu0 0.0
  %344 = vmatpush1.msra.mxu0 0.0
  %345 = vmatprep.subr.mxu0 0.0
  %346 = vmatpush1.msra.mxu0 0.0
  %347 = vmatprep.subr.mxu0 0.0
  %348 = vmatpush1.msra.mxu0 0.0
  %349 = vmatprep.subr.mxu0 0.0
  %350 = vmatpush1.msra.mxu0 0.0
  %351 = vmatprep.subr.mxu0 0.0
  %352 = vmatpush1.msra.mxu0 0.0
  %353 = vmatprep.subr.mxu0 0.0
  %354 = vmatpush1.msra.mxu0 0.0
  %355 = vmatprep.subr.mxu0 0.0
  %356 = vmatpush1.msra.mxu0 0.0
  %357 = vmatprep.subr.mxu0 0.0
  %358 = vmatpush1.msra.mxu0 0.0
  %359 = vmatprep.subr.mxu0 0.0
  %360 = vmatpush1.msra.mxu0 0.0
  %361 = vmatprep.subr.mxu0 0.0
  %362 = vmatpush1.msra.mxu0 0.0
  %363 = vmatprep.subr.mxu0 0.0
  %364 = vmatpush1.msra.mxu0 0.0
  %365 = vmatprep.subr.mxu0 0.0
  %366 = vmatpush1.msra.mxu0 0.0
  %367 = vmatprep.subr.mxu0 0.0
  %368 = vmatpush1.msra.mxu0 0.0
  %369 = vmatprep.subr.mxu0 0.0
  %370 = vmatpush1.msra.mxu0 0.0
  %371 = vmatprep.subr.mxu0 0.0
  %372 = vmatpush1.msra.mxu0 0.0
  %373 = vmatprep.subr.mxu0 0.0
  %374 = vmatpush1.msra.mxu0 0.0
  %375 = vmatprep.subr.mxu0 0.0
  %376 = vmatpush1.msra.mxu0 0.0
  %377 = vmatprep.subr.mxu0 0.0
  %378 = vmatpush1.msra.mxu0 0.0
  %379 = vmatprep.subr.mxu0 0.0
  %380 = vmatpush1.msra.mxu0 0.0
  %381 = vmatprep.subr.mxu0 0.0
  %382 = vmatpush1.msra.mxu0 0.0
  %383 = vmatprep.subr.mxu0 0.0
  %384 = vmatpush1.msra.mxu0 0.0
  %385 = vmatprep.mubr.f32.mxu0 0.0
  %386 = vmatmul.mubr.f32.gmra.mrb[0].mxu0 %v319
  %v387 = vpop.f32.mrb[0].mxu0
  %v388 = vadd.f32 0.0, %v387
  %v389 = vpop.f32.mrb[0].mxu0
  %390 = vdwg.mxu0
  %v392 = vrot.slane %v388, 6
  %v393 = vrot.slane %v388, 7
  %v396 = vadd.f32 %v26, %v392
  %v397 = vadd.f32 %v27, %v393
  %v398 = vxor.u32 %v396, 2147483648
  %v399 = vxor.u32 %v397, 2147483648
  %v400 = vmul.f32 %v398, 1.442695
  %v401 = vpow.pop %v400
  %v402 = vmul.f32 %v399, 1.442695
  %v403 = vpow.pop %v402
  %v404 = vadd.f32 %v401, 1.0
  %v405 = vadd.f32 %v403, 1.0
  %v406 = vrcp.pop %v404
  %v407 = vmul.f32 1.0, %v406
  %v408 = vrcp.pop %v405
  %v409 = vmul.f32 1.0, %v408
  %v410 = vadd.f32 %v388, %v126
  %v412 = vrot.slane %v410, 6
  %v413 = vrot.slane %v410, 7
  %414 = vrot.lane.b32.xlu0 %v412, 64
  %v415 = vpop.permute.xlu0 %414
  %416 = vrot.lane.b32.xlu0 %v413, 64
  %v417 = vpop.permute.xlu0 %416
  %v420 = vmul.f32 %v407, %v415
  %v421 = vmul.f32 %v409, %v417
  %424 = vrot.lane.b32.xlu0 %v420, 64
  %v425 = vpop.permute.xlu0 %424
  %426 = vrot.lane.b32.xlu0 %v421, 64
  %v427 = vpop.permute.xlu0 %426
  %v430 = vadd.f32 %v26, %v425
  %v431 = vadd.f32 %v27, %v427
  %v432 = vtanh.pop %v430
  %v433 = vtanh.pop %v431
  %v434 = vsub.f32 1.0, %v407
  %v435 = vsub.f32 1.0, %v409
  %438 = vrot.lane.b32.xlu0 %v432, 96
  %v439 = vpop.permute.xlu0 %438
  %440 = vrot.lane.b32.xlu0 %v433, 96
  %v441 = vpop.permute.xlu0 %440
  %v444 = vmul.f32 %v434, %v439
  %v445 = vmul.f32 %v435, %v441
  %v446 = vrot.slane %v311, 7
  %v447 = vrot.slane %v312, 7
  %v450 = vmul.f32 %v407, %v446
  %v451 = vmul.f32 %v409, %v447
  %v452 = vadd.f32 %v444, %v450
  %v453 = vadd.f32 %v445, %v451
  %v456 = vrot.slane %v452, 2
  %v457 = vrot.slane %v453, 1
  %v458 = vsel %vm177, %v457, %v456
  %459 = vrot.lane.b32.xlu0 %v458, 96
  %v460 = vpop.permute.xlu0 %459
  %v461 = vsel %vm28, %v460, 0
  %463 = vmatprep.subr.mxu0 0.0
  %464 = vmatpush1.msra.mxu0 %v21
  %465 = vmatprep.subr.mxu0 0.0
  %466 = vmatpush1.msra.mxu0 %v22
  %467 = vmatprep.subr.mxu0 0.0
  %468 = vmatpush1.msra.mxu0 %v23
  %469 = vmatprep.subr.mxu0 0.0
  %470 = vmatpush1.msra.mxu0 %v24
  %471 = vmatprep.subr.mxu0 0.0
  %472 = vmatpush1.msra.mxu0 0.0
  %473 = vmatprep.subr.mxu0 0.0
  %474 = vmatpush1.msra.mxu0 0.0
  %475 = vmatprep.subr.mxu0 0.0
  %476 = vmatpush1.msra.mxu0 0.0
  %477 = vmatprep.subr.mxu0 0.0
  %478 = vmatpush1.msra.mxu0 0.0
  %479 = vmatprep.subr.mxu0 0.0
  %480 = vmatpush1.msra.mxu0 0.0
  %481 = vmatprep.subr.mxu0 0.0
  %482 = vmatpush1.msra.mxu0 0.0
  %483 = vmatprep.subr.mxu0 0.0
  %484 = vmatpush1.msra.mxu0 0.0
  %485 = vmatprep.subr.mxu0 0.0
  %486 = vmatpush1.msra.mxu0 0.0
  %487 = vmatprep.subr.mxu0 0.0
  %488 = vmatpush1.msra.mxu0 0.0
  %489 = vmatprep.subr.mxu0 0.0
  %490 = vmatpush1.msra.mxu0 0.0
  %491 = vmatprep.subr.mxu0 0.0
  %492 = vmatpush1.msra.mxu0 0.0
  %493 = vmatprep.subr.mxu0 0.0
  %494 = vmatpush1.msra.mxu0 0.0
  %495 = vmatprep.subr.mxu0 0.0
  %496 = vmatpush1.msra.mxu0 0.0
  %497 = vmatprep.subr.mxu0 0.0
  %498 = vmatpush1.msra.mxu0 0.0
  %499 = vmatprep.subr.mxu0 0.0
  %500 = vmatpush1.msra.mxu0 0.0
  %501 = vmatprep.subr.mxu0 0.0
  %502 = vmatpush1.msra.mxu0 0.0
  %503 = vmatprep.subr.mxu0 0.0
  %504 = vmatpush1.msra.mxu0 0.0
  %505 = vmatprep.subr.mxu0 0.0
  %506 = vmatpush1.msra.mxu0 0.0
  %507 = vmatprep.subr.mxu0 0.0
  %508 = vmatpush1.msra.mxu0 0.0
  %509 = vmatprep.subr.mxu0 0.0
  %510 = vmatpush1.msra.mxu0 0.0
  %511 = vmatprep.subr.mxu0 0.0
  %512 = vmatpush1.msra.mxu0 0.0
  %513 = vmatprep.subr.mxu0 0.0
  %514 = vmatpush1.msra.mxu0 0.0
  %515 = vmatprep.subr.mxu0 0.0
  %516 = vmatpush1.msra.mxu0 0.0
  %517 = vmatprep.subr.mxu0 0.0
  %518 = vmatpush1.msra.mxu0 0.0
  %519 = vmatprep.subr.mxu0 0.0
  %520 = vmatpush1.msra.mxu0 0.0
  %521 = vmatprep.subr.mxu0 0.0
  %522 = vmatpush1.msra.mxu0 0.0
  %523 = vmatprep.subr.mxu0 0.0
  %524 = vmatpush1.msra.mxu0 0.0
  %525 = vmatprep.subr.mxu0 0.0
  %526 = vmatpush1.msra.mxu0 0.0
  %527 = vmatprep.mubr.f32.mxu0 0.0
  %528 = vmatmul.mubr.f32.gmra.mrb[0].mxu0 %v461
  %v529 = vpop.f32.mrb[0].mxu0
  %v530 = vadd.f32 0.0, %v529
  %v531 = vpop.f32.mrb[0].mxu0
  %532 = vdwg.mxu0
  %v534 = vrot.slane %v530, 5
  %v535 = vrot.slane %v530, 6
  %v538 = vadd.f32 %v26, %v534
  %v539 = vadd.f32 %v27, %v535
  %v540 = vxor.u32 %v538, 2147483648
  %v541 = vxor.u32 %v539, 2147483648
  %v542 = vmul.f32 %v540, 1.442695
  %v543 = vpow.pop %v542
  %v544 = vmul.f32 %v541, 1.442695
  %v545 = vpow.pop %v544
  %v546 = vadd.f32 %v543, 1.0
  %v547 = vadd.f32 %v545, 1.0
  %v548 = vrcp.pop %v546
  %v549 = vmul.f32 1.0, %v548
  %v550 = vrcp.pop %v547
  %v551 = vmul.f32 1.0, %v550
  %v552 = vadd.f32 %v530, %v126
  %v554 = vrot.slane %v552, 5
  %v555 = vrot.slane %v552, 6
  %556 = vrot.lane.b32.xlu0 %v554, 64
  %v557 = vpop.permute.xlu0 %556
  %558 = vrot.lane.b32.xlu0 %v555, 64
  %v559 = vpop.permute.xlu0 %558
  %v562 = vmul.f32 %v549, %v557
  %v563 = vmul.f32 %v551, %v559
  %566 = vrot.lane.b32.xlu0 %v562, 64
  %v567 = vpop.permute.xlu0 %566
  %568 = vrot.lane.b32.xlu0 %v563, 64
  %v569 = vpop.permute.xlu0 %568
  %v572 = vadd.f32 %v26, %v567
  %v573 = vadd.f32 %v27, %v569
  %v574 = vtanh.pop %v572
  %v575 = vtanh.pop %v573
  %v576 = vsub.f32 1.0, %v549
  %v577 = vsub.f32 1.0, %v551
  %580 = vrot.lane.b32.xlu0 %v574, 96
  %v581 = vpop.permute.xlu0 %580
  %582 = vrot.lane.b32.xlu0 %v575, 96
  %v583 = vpop.permute.xlu0 %582
  %v586 = vmul.f32 %v576, %v581
  %v587 = vmul.f32 %v577, %v583
  %v588 = vrot.slane %v452, 7
  %v589 = vrot.slane %v453, 7
  %v592 = vmul.f32 %v549, %v588
  %v593 = vmul.f32 %v551, %v589
  %v594 = vadd.f32 %v586, %v592
  %v595 = vadd.f32 %v587, %v593
  %v598 = vrot.slane %v594, 3
  %v599 = vrot.slane %v595, 2
  %v600 = vsel %vm177, %v599, %v598
  %601 = vrot.lane.b32.xlu0 %v600, 96
  %v602 = vpop.permute.xlu0 %601
  %v603 = vsel %vm28, %v602, 0
  %605 = vmatprep.subr.mxu0 0.0
  %606 = vmatpush1.msra.mxu0 %v21
  %607 = vmatprep.subr.mxu0 0.0
  %608 = vmatpush1.msra.mxu0 %v22
  %609 = vmatprep.subr.mxu0 0.0
  %610 = vmatpush1.msra.mxu0 %v23
  %611 = vmatprep.subr.mxu0 0.0
  %612 = vmatpush1.msra.mxu0 %v24
  %613 = vmatprep.subr.mxu0 0.0
  %614 = vmatpush1.msra.mxu0 0.0
  %615 = vmatprep.subr.mxu0 0.0
  %616 = vmatpush1.msra.mxu0 0.0
  %617 = vmatprep.subr.mxu0 0.0
  %618 = vmatpush1.msra.mxu0 0.0
  %619 = vmatprep.subr.mxu0 0.0
  %620 = vmatpush1.msra.mxu0 0.0
  %621 = vmatprep.subr.mxu0 0.0
  %622 = vmatpush1.msra.mxu0 0.0
  %623 = vmatprep.subr.mxu0 0.0
  %624 = vmatpush1.msra.mxu0 0.0
  %625 = vmatprep.subr.mxu0 0.0
  %626 = vmatpush1.msra.mxu0 0.0
  %627 = vmatprep.subr.mxu0 0.0
  %628 = vmatpush1.msra.mxu0 0.0
  %629 = vmatprep.subr.mxu0 0.0
  %630 = vmatpush1.msra.mxu0 0.0
  %631 = vmatprep.subr.mxu0 0.0
  %632 = vmatpush1.msra.mxu0 0.0
  %633 = vmatprep.subr.mxu0 0.0
  %634 = vmatpush1.msra.mxu0 0.0
  %635 = vmatprep.subr.mxu0 0.0
  %636 = vmatpush1.msra.mxu0 0.0
  %637 = vmatprep.subr.mxu0 0.0
  %638 = vmatpush1.msra.mxu0 0.0
  %639 = vmatprep.subr.mxu0 0.0
  %640 = vmatpush1.msra.mxu0 0.0
  %641 = vmatprep.subr.mxu0 0.0
  %642 = vmatpush1.msra.mxu0 0.0
  %643 = vmatprep.subr.mxu0 0.0
  %644 = vmatpush1.msra.mxu0 0.0
  %645 = vmatprep.subr.mxu0 0.0
  %646 = vmatpush1.msra.mxu0 0.0
  %647 = vmatprep.subr.mxu0 0.0
  %648 = vmatpush1.msra.mxu0 0.0
  %649 = vmatprep.subr.mxu0 0.0
  %650 = vmatpush1.msra.mxu0 0.0
  %651 = vmatprep.subr.mxu0 0.0
  %652 = vmatpush1.msra.mxu0 0.0
  %653 = vmatprep.subr.mxu0 0.0
  %654 = vmatpush1.msra.mxu0 0.0
  %655 = vmatprep.subr.mxu0 0.0
  %656 = vmatpush1.msra.mxu0 0.0
  %657 = vmatprep.subr.mxu0 0.0
  %658 = vmatpush1.msra.mxu0 0.0
  %659 = vmatprep.subr.mxu0 0.0
  %660 = vmatpush1.msra.mxu0 0.0
  %661 = vmatprep.subr.mxu0 0.0
  %662 = vmatpush1.msra.mxu0 0.0
  %663 = vmatprep.subr.mxu0 0.0
  %664 = vmatpush1.msra.mxu0 0.0
  %665 = vmatprep.subr.mxu0 0.0
  %666 = vmatpush1.msra.mxu0 0.0
  %667 = vmatprep.subr.mxu0 0.0
  %668 = vmatpush1.msra.mxu0 0.0
  %669 = vmatprep.mubr.f32.mxu0 0.0
  %670 = vmatmul.mubr.f32.gmra.mrb[0].mxu0 %v603
  %v671 = vpop.f32.mrb[0].mxu0
  %v672 = vadd.f32 0.0, %v671
  %v673 = vpop.f32.mrb[0].mxu0
  %674 = vdwg.mxu0
  %v676 = vrot.slane %v672, 4
  %v677 = vrot.slane %v672, 5
  %v680 = vadd.f32 %v26, %v676
  %v681 = vadd.f32 %v27, %v677
  %v682 = vxor.u32 %v680, 2147483648
  %v683 = vxor.u32 %v681, 2147483648
  %v684 = vmul.f32 %v682, 1.442695
  %v685 = vpow.pop %v684
  %v686 = vmul.f32 %v683, 1.442695
  %v687 = vpow.pop %v686
  %v688 = vadd.f32 %v685, 1.0
  %v689 = vadd.f32 %v687, 1.0
  %v690 = vrcp.pop %v688
  %v691 = vmul.f32 1.0, %v690
  %v692 = vrcp.pop %v689
  %v693 = vmul.f32 1.0, %v692
  %v694 = vadd.f32 %v672, %v126
  %v696 = vrot.slane %v694, 4
  %v697 = vrot.slane %v694, 5
  %698 = vrot.lane.b32.xlu0 %v696, 64
  %v699 = vpop.permute.xlu0 %698
  %700 = vrot.lane.b32.xlu0 %v697, 64
  %v701 = vpop.permute.xlu0 %700
  %v704 = vmul.f32 %v691, %v699
  %v705 = vmul.f32 %v693, %v701
  %708 = vrot.lane.b32.xlu0 %v704, 64
  %v709 = vpop.permute.xlu0 %708
  %710 = vrot.lane.b32.xlu0 %v705, 64
  %v711 = vpop.permute.xlu0 %710
  %v714 = vadd.f32 %v26, %v709
  %v715 = vadd.f32 %v27, %v711
  %v716 = vtanh.pop %v714
  %v717 = vtanh.pop %v715
  %v718 = vsub.f32 1.0, %v691
  %v719 = vsub.f32 1.0, %v693
  %722 = vrot.lane.b32.xlu0 %v716, 96
  %v723 = vpop.permute.xlu0 %722
  %724 = vrot.lane.b32.xlu0 %v717, 96
  %v725 = vpop.permute.xlu0 %724
  %v728 = vmul.f32 %v718, %v723
  %v729 = vmul.f32 %v719, %v725
  %v730 = vrot.slane %v594, 7
  %v731 = vrot.slane %v595, 7
  %v734 = vmul.f32 %v691, %v730
  %v735 = vmul.f32 %v693, %v731
  %v736 = vadd.f32 %v728, %v734
  %v737 = vadd.f32 %v729, %v735
  %v740 = vrot.slane %v736, 4
  %v741 = vrot.slane %v737, 3
  %v742 = vsel %vm177, %v741, %v740
  %743 = vrot.lane.b32.xlu0 %v742, 96
  %v744 = vpop.permute.xlu0 %743
  %v745 = vsel %vm28, %v744, 0
  %747 = vmatprep.subr.mxu0 0.0
  %748 = vmatpush1.msra.mxu0 %v21
  %749 = vmatprep.subr.mxu0 0.0
  %750 = vmatpush1.msra.mxu0 %v22
  %751 = vmatprep.subr.mxu0 0.0
  %752 = vmatpush1.msra.mxu0 %v23
  %753 = vmatprep.subr.mxu0 0.0
  %754 = vmatpush1.msra.mxu0 %v24
  %755 = vmatprep.subr.mxu0 0.0
  %756 = vmatpush1.msra.mxu0 0.0
  %757 = vmatprep.subr.mxu0 0.0
  %758 = vmatpush1.msra.mxu0 0.0
  %759 = vmatprep.subr.mxu0 0.0
  %760 = vmatpush1.msra.mxu0 0.0
  %761 = vmatprep.subr.mxu0 0.0
  %762 = vmatpush1.msra.mxu0 0.0
  %763 = vmatprep.subr.mxu0 0.0
  %764 = vmatpush1.msra.mxu0 0.0
  %765 = vmatprep.subr.mxu0 0.0
  %766 = vmatpush1.msra.mxu0 0.0
  %767 = vmatprep.subr.mxu0 0.0
  %768 = vmatpush1.msra.mxu0 0.0
  %769 = vmatprep.subr.mxu0 0.0
  %770 = vmatpush1.msra.mxu0 0.0
  %771 = vmatprep.subr.mxu0 0.0
  %772 = vmatpush1.msra.mxu0 0.0
  %773 = vmatprep.subr.mxu0 0.0
  %774 = vmatpush1.msra.mxu0 0.0
  %775 = vmatprep.subr.mxu0 0.0
  %776 = vmatpush1.msra.mxu0 0.0
  %777 = vmatprep.subr.mxu0 0.0
  %778 = vmatpush1.msra.mxu0 0.0
  %779 = vmatprep.subr.mxu0 0.0
  %780 = vmatpush1.msra.mxu0 0.0
  %781 = vmatprep.subr.mxu0 0.0
  %782 = vmatpush1.msra.mxu0 0.0
  %783 = vmatprep.subr.mxu0 0.0
  %784 = vmatpush1.msra.mxu0 0.0
  %785 = vmatprep.subr.mxu0 0.0
  %786 = vmatpush1.msra.mxu0 0.0
  %787 = vmatprep.subr.mxu0 0.0
  %788 = vmatpush1.msra.mxu0 0.0
  %789 = vmatprep.subr.mxu0 0.0
  %790 = vmatpush1.msra.mxu0 0.0
  %791 = vmatprep.subr.mxu0 0.0
  %792 = vmatpush1.msra.mxu0 0.0
  %793 = vmatprep.subr.mxu0 0.0
  %794 = vmatpush1.msra.mxu0 0.0
  %795 = vmatprep.subr.mxu0 0.0
  %796 = vmatpush1.msra.mxu0 0.0
  %797 = vmatprep.subr.mxu0 0.0
  %798 = vmatpush1.msra.mxu0 0.0
  %799 = vmatprep.subr.mxu0 0.0
  %800 = vmatpush1.msra.mxu0 0.0
  %801 = vmatprep.subr.mxu0 0.0
  %802 = vmatpush1.msra.mxu0 0.0
  %803 = vmatprep.subr.mxu0 0.0
  %804 = vmatpush1.msra.mxu0 0.0
  %805 = vmatprep.subr.mxu0 0.0
  %806 = vmatpush1.msra.mxu0 0.0
  %807 = vmatprep.subr.mxu0 0.0
  %808 = vmatpush1.msra.mxu0 0.0
  %809 = vmatprep.subr.mxu0 0.0
  %810 = vmatpush1.msra.mxu0 0.0
  %811 = vmatprep.mubr.f32.mxu0 0.0
  %812 = vmatmul.mubr.f32.gmra.mrb[0].mxu0 %v745
  %v813 = vpop.f32.mrb[0].mxu0
  %v814 = vadd.f32 0.0, %v813
  %v815 = vpop.f32.mrb[0].mxu0
  %816 = vdwg.mxu0
  %v818 = vrot.slane %v814, 3
  %v819 = vrot.slane %v814, 4
  %v822 = vadd.f32 %v26, %v818
  %v823 = vadd.f32 %v27, %v819
  %v824 = vxor.u32 %v822, 2147483648
  %v825 = vxor.u32 %v823, 2147483648
  %v826 = vmul.f32 %v824, 1.442695
  %v827 = vpow.pop %v826
  %v828 = vmul.f32 %v825, 1.442695
  %v829 = vpow.pop %v828
  %v830 = vadd.f32 %v827, 1.0
  %v831 = vadd.f32 %v829, 1.0
  %v832 = vrcp.pop %v830
  %v833 = vmul.f32 1.0, %v832
  %v834 = vrcp.pop %v831
  %v835 = vmul.f32 1.0, %v834
  %v836 = vadd.f32 %v814, %v126
  %v838 = vrot.slane %v836, 3
  %v839 = vrot.slane %v836, 4
  %840 = vrot.lane.b32.xlu0 %v838, 64
  %v841 = vpop.permute.xlu0 %840
  %842 = vrot.lane.b32.xlu0 %v839, 64
  %v843 = vpop.permute.xlu0 %842
  %v846 = vmul.f32 %v833, %v841
  %v847 = vmul.f32 %v835, %v843
  %850 = vrot.lane.b32.xlu0 %v846, 64
  %v851 = vpop.permute.xlu0 %850
  %852 = vrot.lane.b32.xlu0 %v847, 64
  %v853 = vpop.permute.xlu0 %852
  %v856 = vadd.f32 %v26, %v851
  %v857 = vadd.f32 %v27, %v853
  %v858 = vtanh.pop %v856
  %v859 = vtanh.pop %v857
  %v860 = vsub.f32 1.0, %v833
  %v861 = vsub.f32 1.0, %v835
  %864 = vrot.lane.b32.xlu0 %v858, 96
  %v865 = vpop.permute.xlu0 %864
  %866 = vrot.lane.b32.xlu0 %v859, 96
  %v867 = vpop.permute.xlu0 %866
  %v870 = vmul.f32 %v860, %v865
  %v871 = vmul.f32 %v861, %v867
  %v872 = vrot.slane %v736, 7
  %v873 = vrot.slane %v737, 7
  %v876 = vmul.f32 %v833, %v872
  %v877 = vmul.f32 %v835, %v873
  %v878 = vadd.f32 %v870, %v876
  %v879 = vadd.f32 %v871, %v877
  %v882 = vrot.slane %v878, 5
  %v883 = vrot.slane %v879, 4
  %v884 = vsel %vm177, %v883, %v882
  %885 = vrot.lane.b32.xlu0 %v884, 96
  %v886 = vpop.permute.xlu0 %885
  %v887 = vsel %vm28, %v886, 0
  %889 = vmatprep.subr.mxu0 0.0
  %890 = vmatpush1.msra.mxu0 %v21
  %891 = vmatprep.subr.mxu0 0.0
  %892 = vmatpush1.msra.mxu0 %v22
  %893 = vmatprep.subr.mxu0 0.0
  %894 = vmatpush1.msra.mxu0 %v23
  %895 = vmatprep.subr.mxu0 0.0
  %896 = vmatpush1.msra.mxu0 %v24
  %897 = vmatprep.subr.mxu0 0.0
  %898 = vmatpush1.msra.mxu0 0.0
  %899 = vmatprep.subr.mxu0 0.0
  %900 = vmatpush1.msra.mxu0 0.0
  %901 = vmatprep.subr.mxu0 0.0
  %902 = vmatpush1.msra.mxu0 0.0
  %903 = vmatprep.subr.mxu0 0.0
  %904 = vmatpush1.msra.mxu0 0.0
  %905 = vmatprep.subr.mxu0 0.0
  %906 = vmatpush1.msra.mxu0 0.0
  %907 = vmatprep.subr.mxu0 0.0
  %908 = vmatpush1.msra.mxu0 0.0
  %909 = vmatprep.subr.mxu0 0.0
  %910 = vmatpush1.msra.mxu0 0.0
  %911 = vmatprep.subr.mxu0 0.0
  %912 = vmatpush1.msra.mxu0 0.0
  %913 = vmatprep.subr.mxu0 0.0
  %914 = vmatpush1.msra.mxu0 0.0
  %915 = vmatprep.subr.mxu0 0.0
  %916 = vmatpush1.msra.mxu0 0.0
  %917 = vmatprep.subr.mxu0 0.0
  %918 = vmatpush1.msra.mxu0 0.0
  %919 = vmatprep.subr.mxu0 0.0
  %920 = vmatpush1.msra.mxu0 0.0
  %921 = vmatprep.subr.mxu0 0.0
  %922 = vmatpush1.msra.mxu0 0.0
  %923 = vmatprep.subr.mxu0 0.0
  %924 = vmatpush1.msra.mxu0 0.0
  %925 = vmatprep.subr.mxu0 0.0
  %926 = vmatpush1.msra.mxu0 0.0
  %927 = vmatprep.subr.mxu0 0.0
  %928 = vmatpush1.msra.mxu0 0.0
  %929 = vmatprep.subr.mxu0 0.0
  %930 = vmatpush1.msra.mxu0 0.0
  %931 = vmatprep.subr.mxu0 0.0
  %932 = vmatpush1.msra.mxu0 0.0
  %933 = vmatprep.subr.mxu0 0.0
  %934 = vmatpush1.msra.mxu0 0.0
  %935 = vmatprep.subr.mxu0 0.0
  %936 = vmatpush1.msra.mxu0 0.0
  %937 = vmatprep.subr.mxu0 0.0
  %938 = vmatpush1.msra.mxu0 0.0
  %939 = vmatprep.subr.mxu0 0.0
  %940 = vmatpush1.msra.mxu0 0.0
  %941 = vmatprep.subr.mxu0 0.0
  %942 = vmatpush1.msra.mxu0 0.0
  %943 = vmatprep.subr.mxu0 0.0
  %944 = vmatpush1.msra.mxu0 0.0
  %945 = vmatprep.subr.mxu0 0.0
  %946 = vmatpush1.msra.mxu0 0.0
  %947 = vmatprep.subr.mxu0 0.0
  %948 = vmatpush1.msra.mxu0 0.0
  %949 = vmatprep.subr.mxu0 0.0
  %950 = vmatpush1.msra.mxu0 0.0
  %951 = vmatprep.subr.mxu0 0.0
  %952 = vmatpush1.msra.mxu0 0.0
  %953 = vmatprep.mubr.f32.mxu0 0.0
  %954 = vmatmul.mubr.f32.gmra.mrb[0].mxu0 %v887
  %v955 = vpop.f32.mrb[0].mxu0
  %v956 = vadd.f32 0.0, %v955
  %v957 = vpop.f32.mrb[0].mxu0
  %958 = vdwg.mxu0
  %v960 = vrot.slane %v956, 2
  %v961 = vrot.slane %v956, 3
  %v964 = vadd.f32 %v26, %v960
  %v965 = vadd.f32 %v27, %v961
  %v966 = vxor.u32 %v964, 2147483648
  %v967 = vxor.u32 %v965, 2147483648
  %v968 = vmul.f32 %v966, 1.442695
  %v969 = vpow.pop %v968
  %v970 = vmul.f32 %v967, 1.442695
  %v971 = vpow.pop %v970
  %v972 = vadd.f32 %v969, 1.0
  %v973 = vadd.f32 %v971, 1.0
  %v974 = vrcp.pop %v972
  %v975 = vmul.f32 1.0, %v974
  %v976 = vrcp.pop %v973
  %v977 = vmul.f32 1.0, %v976
  %v978 = vadd.f32 %v956, %v126
  %v980 = vrot.slane %v978, 2
  %v981 = vrot.slane %v978, 3
  %982 = vrot.lane.b32.xlu0 %v980, 64
  %v983 = vpop.permute.xlu0 %982
  %984 = vrot.lane.b32.xlu0 %v981, 64
  %v985 = vpop.permute.xlu0 %984
  %v988 = vmul.f32 %v975, %v983
  %v989 = vmul.f32 %v977, %v985
  %992 = vrot.lane.b32.xlu0 %v988, 64
  %v993 = vpop.permute.xlu0 %992
  %994 = vrot.lane.b32.xlu0 %v989, 64
  %v995 = vpop.permute.xlu0 %994
  %v998 = vadd.f32 %v26, %v993
  %v999 = vadd.f32 %v27, %v995
  %v1000 = vtanh.pop %v998
  %v1001 = vtanh.pop %v999
  %v1002 = vsub.f32 1.0, %v975
  %v1003 = vsub.f32 1.0, %v977
  %1006 = vrot.lane.b32.xlu0 %v1000, 96
  %v1007 = vpop.permute.xlu0 %1006
  %1008 = vrot.lane.b32.xlu0 %v1001, 96
  %v1009 = vpop.permute.xlu0 %1008
  %v1012 = vmul.f32 %v1002, %v1007
  %v1013 = vmul.f32 %v1003, %v1009
  %v1014 = vrot.slane %v878, 7
  %v1015 = vrot.slane %v879, 7
  %v1018 = vmul.f32 %v975, %v1014
  %v1019 = vmul.f32 %v977, %v1015
  %v1020 = vadd.f32 %v1012, %v1018
  %v1021 = vadd.f32 %v1013, %v1019
  %v1024 = vrot.slane %v1020, 6
  %v1025 = vrot.slane %v1021, 5
  %v1026 = vsel %vm177, %v1025, %v1024
  %1027 = vrot.lane.b32.xlu0 %v1026, 96
  %v1028 = vpop.permute.xlu0 %1027
  %v1029 = vsel %vm28, %v1028, 0
  %1031 = vmatprep.subr.mxu0 0.0
  %1032 = vmatpush1.msra.mxu0 %v21
  %1033 = vmatprep.subr.mxu0 0.0
  %1034 = vmatpush1.msra.mxu0 %v22
  %1035 = vmatprep.subr.mxu0 0.0
  %1036 = vmatpush1.msra.mxu0 %v23
  %1037 = vmatprep.subr.mxu0 0.0
  %1038 = vmatpush1.msra.mxu0 %v24
  %1039 = vmatprep.subr.mxu0 0.0
  %1040 = vmatpush1.msra.mxu0 0.0
  %1041 = vmatprep.subr.mxu0 0.0
  %1042 = vmatpush1.msra.mxu0 0.0
  %1043 = vmatprep.subr.mxu0 0.0
  %1044 = vmatpush1.msra.mxu0 0.0
  %1045 = vmatprep.subr.mxu0 0.0
  %1046 = vmatpush1.msra.mxu0 0.0
  %1047 = vmatprep.subr.mxu0 0.0
  %1048 = vmatpush1.msra.mxu0 0.0
  %1049 = vmatprep.subr.mxu0 0.0
  %1050 = vmatpush1.msra.mxu0 0.0
  %1051 = vmatprep.subr.mxu0 0.0
  %1052 = vmatpush1.msra.mxu0 0.0
  %1053 = vmatprep.subr.mxu0 0.0
  %1054 = vmatpush1.msra.mxu0 0.0
  %1055 = vmatprep.subr.mxu0 0.0
  %1056 = vmatpush1.msra.mxu0 0.0
  %1057 = vmatprep.subr.mxu0 0.0
  %1058 = vmatpush1.msra.mxu0 0.0
  %1059 = vmatprep.subr.mxu0 0.0
  %1060 = vmatpush1.msra.mxu0 0.0
  %1061 = vmatprep.subr.mxu0 0.0
  %1062 = vmatpush1.msra.mxu0 0.0
  %1063 = vmatprep.subr.mxu0 0.0
  %1064 = vmatpush1.msra.mxu0 0.0
  %1065 = vmatprep.subr.mxu0 0.0
  %1066 = vmatpush1.msra.mxu0 0.0
  %1067 = vmatprep.subr.mxu0 0.0
  %1068 = vmatpush1.msra.mxu0 0.0
  %1069 = vmatprep.subr.mxu0 0.0
  %1070 = vmatpush1.msra.mxu0 0.0
  %1071 = vmatprep.subr.mxu0 0.0
  %1072 = vmatpush1.msra.mxu0 0.0
  %1073 = vmatprep.subr.mxu0 0.0
  %1074 = vmatpush1.msra.mxu0 0.0
  %1075 = vmatprep.subr.mxu0 0.0
  %1076 = vmatpush1.msra.mxu0 0.0
  %1077 = vmatprep.subr.mxu0 0.0
  %1078 = vmatpush1.msra.mxu0 0.0
  %1079 = vmatprep.subr.mxu0 0.0
  %1080 = vmatpush1.msra.mxu0 0.0
  %1081 = vmatprep.subr.mxu0 0.0
  %1082 = vmatpush1.msra.mxu0 0.0
  %1083 = vmatprep.subr.mxu0 0.0
  %1084 = vmatpush1.msra.mxu0 0.0
  %1085 = vmatprep.subr.mxu0 0.0
  %1086 = vmatpush1.msra.mxu0 0.0
  %1087 = vmatprep.subr.mxu0 0.0
  %1088 = vmatpush1.msra.mxu0 0.0
  %1089 = vmatprep.subr.mxu0 0.0
  %1090 = vmatpush1.msra.mxu0 0.0
  %1091 = vmatprep.subr.mxu0 0.0
  %1092 = vmatpush1.msra.mxu0 0.0
  %1093 = vmatprep.subr.mxu0 0.0
  %1094 = vmatpush1.msra.mxu0 0.0
  %1095 = vmatprep.mubr.f32.mxu0 0.0
  %1096 = vmatmul.mubr.f32.gmra.mrb[0].mxu0 %v1029
  %v1097 = vpop.f32.mrb[0].mxu0
  %v1098 = vadd.f32 0.0, %v1097
  %v1099 = vpop.f32.mrb[0].mxu0
  %1100 = vdwg.mxu0
  %v1102 = vrot.slane %v1098, 1
  %v1103 = vrot.slane %v1098, 2
  %v1106 = vadd.f32 %v26, %v1102
  %v1107 = vadd.f32 %v27, %v1103
  %v1108 = vxor.u32 %v1106, 2147483648
  %v1109 = vxor.u32 %v1107, 2147483648
  %v1110 = vmul.f32 %v1108, 1.442695
  %v1111 = vpow.pop %v1110
  %v1112 = vmul.f32 %v1109, 1.442695
  %v1113 = vpow.pop %v1112
  %v1114 = vadd.f32 %v1111, 1.0
  %v1115 = vadd.f32 %v1113, 1.0
  %v1116 = vrcp.pop %v1114
  %v1117 = vmul.f32 1.0, %v1116
  %v1118 = vrcp.pop %v1115
  %v1119 = vmul.f32 1.0, %v1118
  %v1120 = vadd.f32 %v1098, %v126
  %v1122 = vrot.slane %v1120, 1
  %v1123 = vrot.slane %v1120, 2
  %1124 = vrot.lane.b32.xlu0 %v1122, 64
  %v1125 = vpop.permute.xlu0 %1124
  %1126 = vrot.lane.b32.xlu0 %v1123, 64
  %v1127 = vpop.permute.xlu0 %1126
  %v1130 = vmul.f32 %v1117, %v1125
  %v1131 = vmul.f32 %v1119, %v1127
  %1134 = vrot.lane.b32.xlu0 %v1130, 64
  %v1135 = vpop.permute.xlu0 %1134
  %1136 = vrot.lane.b32.xlu0 %v1131, 64
  %v1137 = vpop.permute.xlu0 %1136
  %v1140 = vadd.f32 %v26, %v1135
  %v1141 = vadd.f32 %v27, %v1137
  %v1142 = vtanh.pop %v1140
  %v1143 = vtanh.pop %v1141
  %v1144 = vsub.f32 1.0, %v1117
  %v1145 = vsub.f32 1.0, %v1119
  %1148 = vrot.lane.b32.xlu0 %v1142, 96
  %v1149 = vpop.permute.xlu0 %1148
  %1150 = vrot.lane.b32.xlu0 %v1143, 96
  %v1151 = vpop.permute.xlu0 %1150
  %v1154 = vmul.f32 %v1144, %v1149
  %v1155 = vmul.f32 %v1145, %v1151
  %v1156 = vrot.slane %v1020, 7
  %v1157 = vrot.slane %v1021, 7
  %v1160 = vmul.f32 %v1117, %v1156
  %v1161 = vmul.f32 %v1119, %v1157
  %v1162 = vadd.f32 %v1154, %v1160
  %v1163 = vadd.f32 %v1155, %v1161
  %v1166 = vrot.slane %v1163, 7
  %1167 = vrot.lane.b32.xlu0 %v1162, 96
  %v1168 = vpop.permute.xlu0 %1167
  %1169 = vrot.lane.b32.xlu0 %v1166, 96
  %v1170 = vpop.permute.xlu0 %1169
  %vm1173 = vcmask 261127
  %1174 = vst.msk [vmem:[#allocation2 - $0x7] sm:$0x80] %vm1173, %v1168
  %vm1175 = vcmask 253952
  %1176 = vst.msk [vmem:[#allocation2 + $0x1] sm:$0x1] %vm1175, %v1170
  %vm1177 = vcmask 1040384
  %v1178 = vsel %vm1177, %v172, %v311
  %v1179 = vsel %vm1177, %v173, %v312
  %vm1180 = vcmask 1041408
  %v1181 = vsel %vm1180, %v1178, %v452
  %v1182 = vsel %vm1180, %v1179, %v453
  %vm1183 = vcmask 1042432
  %v1184 = vsel %vm1183, %v1181, %v594
  %v1185 = vsel %vm1183, %v1182, %v595
  %vm1186 = vcmask 1043456
  %v1187 = vsel %vm1186, %v1184, %v736
  %v1188 = vsel %vm1186, %v1185, %v737
  %vm1189 = vcmask 1044480
  %v1190 = vsel %vm1189, %v1187, %v878
  %v1191 = vsel %vm1189, %v1188, %v879
  %vm1192 = vcmask 1045504
  %v1193 = vsel %vm1192, %v1190, %v1020
  %v1194 = vsel %vm1192, %v1191, %v1021
  %vm1195 = vcmask 1046528
  %v1196 = vsel %vm1195, %v1193, %v1162
  %v1197 = vsel %vm1195, %v1194, %v1163
  %1200 = vrot.lane.b32.xlu0 %v1196, 96
  %v1201 = vpop.permute.xlu0 %1200
  %1202 = vrot.lane.b32.xlu0 %v1197, 96
  %v1203 = vpop.permute.xlu0 %1202
  %1206 = vst.msk [vmem:[%s3] sm:$0xff] %vm28, %v1201
  %1207 = vst.msk [vmem:[%s3 + $0x8] sm:$0xff] %vm28, %v1203
  // Predicated region
  $region18: #{gru_classifier_forward.4} parent=0 // pred_check
    _
  $region19: #{gru_classifier_forward.4} parent=0 // pred_check_branch
    %1209 = sbr.rel (0) target = $region21
  $region20: #{gru_classifier_forward.4} parent=0 // pred_region
    _
  $region21: #{gru_classifier_forward.4} parent=0 // pred_fallthru
    _
  // Predicated region
  $region22: #{gru_classifier_forward.4} parent=0 // pred_check
    _
  $region23: #{gru_classifier_forward.4} parent=0 // pred_check_branch
    %1211 = sbr.rel (0) target = $region25
  $region24: #{gru_classifier_forward.4} parent=0 // pred_region
    _
  $region25: #{gru_classifier_forward.4} parent=0 // pred_fallthru
    _

</llo_original>
